<compile_context>
chip_gen: v7x
topology: tpu7x:2x2x1
jax: 0.10.0
libtpu: 0.0.40
codegen_flags: <defaults>
</compile_context>

<pallas_src>
import math
import functools

import jax
import jax.numpy as jnp
from jax.experimental import pallas as pl
from jax.experimental.pallas import tpu as pltpu

LN_EPS = 1e-5                       # PyTorch LayerNorm default
MM_DTYPE = jnp.bfloat16             # MXU operand dtype (set to jnp.float32 for full f32)
VMEM_LIMIT = 48 * 1024 * 1024       # > default scoped limit, < v7x 64 MiB physical


# --------------------------------------------------------------------------- #
# helpers
# --------------------------------------------------------------------------- #
def _layer_norm(x, gamma, beta):
    mu = jnp.mean(x, axis=-1, keepdims=True)
    xc = x - mu
    var = jnp.mean(xc * xc, axis=-1, keepdims=True)
    inv = jax.lax.rsqrt(var + LN_EPS)
    return xc * inv * gamma + beta


def _swap01(x):
    """(a, b, c) -> (b, a, c), lane-layout aware (minor dim untouched)."""
    if hasattr(pltpu, "einshape"):
        return pltpu.einshape("abc->bac", x)
    return jnp.swapaxes(x, 0, 1)


def _seq_tile(n, target):
    """Largest divisor of n that is <= target and a multiple of 8 (else n)."""
    if n <= target:
        return n
    for cand in range(target, 7, -1):
        if cand % 8 == 0 and n % cand == 0:
            return cand
    return n


def _hidden_tile(n, target=1024):
    """Largest divisor of n that is <= target and a multiple of 128 (else n)."""
    if n <= target:
        return n
    for cand in range(target, 127, -1):
        if cand % 128 == 0 and n % cand == 0:
            return cand
    return n


def _const_spec(shape):
    """Whole-array block, same block for every grid step (weights / params)."""
    return pl.BlockSpec(shape, lambda *_: tuple(0 for _ in shape))


# --------------------------------------------------------------------------- #
# kernel 1: self-attention sub-block   y = x + SA(LN1(x))
# --------------------------------------------------------------------------- #
def attn_kernel(xq_ref, xf_ref, wqkv_ref, bqkv_ref, wo_ref, bo_ref,
                ln1w_ref, ln1b_ref, out_ref, k_scr, v_scr,
                *, num_heads, tkv):
    nh = num_heads
    _, TQ, D = xq_ref.shape
    S = xf_ref.shape[1]
    hd = D // nh
    scale = 1.0 / math.sqrt(hd)

    # K / V for the whole sequence: computed once per batch element (query tile
    # 0) and kept resident in heads-major VMEM scratch across query tiles.
    @pl.when(pl.program_id(1) == 0)
    def _():
        xn = _layer_norm(xf_ref[0], ln1w_ref[0], ln1b_ref[0]).astype(MM_DTYPE)
        k = jnp.dot(xn, wqkv_ref[1], preferred_element_type=jnp.float32) + bqkv_ref[1]
        v = jnp.dot(xn, wqkv_ref[2], preferred_element_type=jnp.float32) + bqkv_ref[2]
        k_scr[...] = _swap01(k.reshape(S, nh, hd)).astype(k_scr.dtype)   # (nh, S, hd)
        v_scr[...] = _swap01(v.reshape(S, nh, hd)).astype(v_scr.dtype)

    # query tile
    xq = xq_ref[0]                                                 # (TQ, D) f32
    xnq = _layer_norm(xq, ln1w_ref[0], ln1b_ref[0]).astype(MM_DTYPE)
    q = jnp.dot(xnq, wqkv_ref[0], preferred_element_type=jnp.float32) + bqkv_ref[0]
    q = _swap01((q * scale).reshape(TQ, nh, hd)).astype(MM_DTYPE)  # (nh, TQ, hd)

    # flash-style online softmax over KV chunks (scores bounded to (nh, TQ, tkv))
    m = jnp.full((nh, TQ, 1), -jnp.inf, jnp.float32)
    l = jnp.zeros((nh, TQ, 1), jnp.float32)
    acc = jnp.zeros((nh, TQ, hd), jnp.float32)
    for c in range(S // tkv):                                      # static trip count
        kc = k_scr[:, c * tkv:(c + 1) * tkv, :]
        vc = v_scr[:, c * tkv:(c + 1) * tkv, :]
        s = jnp.einsum('hqd,hkd->hqk', q, kc, preferred_element_type=jnp.float32)
        m_new = jnp.maximum(m, jnp.max(s, axis=-1, keepdims=True))
        alpha = jnp.exp(m - m_new)
        p = jnp.exp(s - m_new)
        l = alpha * l + jnp.sum(p, axis=-1, keepdims=True)
        acc = alpha * acc + jnp.einsum('hqk,hkd->hqd', p.astype(MM_DTYPE), vc,
                                       preferred_element_type=jnp.float32)
        m = m_new

    attn = acc * pl.reciprocal(l, approx=True)                     # EUP divide
    attn = _swap01(attn).reshape(TQ, D).astype(MM_DTYPE)           # (TQ, D)

    o = jnp.dot(attn, wo_ref[...], preferred_element_type=jnp.float32) + bo_ref[0]
    out_ref[0] = xq + o                                            # dropout1 == identity


def attention_block(x, p, num_heads):
    B, S, D = x.shape
    nh = num_heads
    hd = D // nh
    tq = _seq_tile(S, target=256)
    tkv = _seq_tile(S, target=512)
    kern = functools.partial(attn_kernel, num_heads=nh, tkv=tkv)
    return pl.pallas_call(
        kern,
        out_shape=jax.ShapeDtypeStruct((B, S, D), jnp.float32),
        grid=(B, S // tq),
        in_specs=[
            pl.BlockSpec((1, tq, D), lambda b, q: (b, q, 0)),      # query-tile rows
            pl.BlockSpec((1, S, D), lambda b, q: (b, 0, 0)),       # full sequence (K/V)
            _const_spec((3, D, D)),                                # wq|wk|wv  [in, out]
            _const_spec((3, 1, D)),                                # bq|bk|bv
            _const_spec((D, D)),                                   # wo        [in, out]
            _const_spec((1, D)),                                   # bo
            _const_spec((1, D)), _const_spec((1, D)),              # ln1 w, b
        ],
        out_specs=pl.BlockSpec((1, tq, D), lambda b, q: (b, q, 0)),
        scratch_shapes=[
            pltpu.VMEM((nh, S, hd), MM_DTYPE),                     # K heads-major
            pltpu.VMEM((nh, S, hd), MM_DTYPE),                     # V heads-major
        ],
        compiler_params=pltpu.CompilerParams(
            # q axis is 'arbitrary' so the K/V scratch built at q == 0 is reused
            # by later query tiles of the same batch element; batch is 'parallel'.
            dimension_semantics=("parallel", "arbitrary"),
            vmem_limit_bytes=VMEM_LIMIT),
    )(x, x, p["wqkv_t"], p["bqkv"], p["wo_t"], p["bo"], p["ln1w"], p["ln1b"])


# --------------------------------------------------------------------------- #
# kernel 2: feed-forward sub-block   out = y + FFN(LN2(y))   [+ final LayerNorm]
# --------------------------------------------------------------------------- #
def ffn_kernel(y_ref, ln2w_ref, ln2b_ref, w1_ref, b1_ref, w2_ref, b2_ref,
               lnfw_ref, lnfb_ref, out_ref, xn_scr, acc_scr, *, apply_final_ln):
    h = pl.program_id(2)

    @pl.when(h == 0)
    def _():
        y = y_ref[0]
        xn_scr[...] = _layer_norm(y, ln2w_ref[0], ln2b_ref[0]).astype(xn_scr.dtype)
        acc_scr[...] = y + b2_ref[0]            # residual + linear2 bias (added once)

    h1 = jnp.dot(xn_scr[...], w1_ref[...],
                 preferred_element_type=jnp.float32) + b1_ref[0]
    h1 = jax.nn.gelu(h1, approximate=False)     # exact (erf) GELU, like F.gelu
    acc_scr[...] += jnp.dot(h1.astype(MM_DTYPE), w2_ref[...],
                            preferred_element_type=jnp.float32)

    @pl.when(h == pl.num_programs(2) - 1)
    def _():
        r = acc_scr[...]                        # dropout2 == identity
        if apply_final_ln:                      # final encoder LayerNorm, fused
            r = _layer_norm(r, lnfw_ref[0], lnfb_ref[0])
        out_ref[0] = r


def ffn_block(y, p, final_ln, apply_final_ln):
    B, S, D = y.shape
    H = p["w1_t"].shape[1]
    tq = _seq_tile(S, target=256)
    ch = _hidden_tile(H)
    kern = functools.partial(ffn_kernel, apply_final_ln=apply_final_ln)
    return pl.pallas_call(
        kern,
        out_shape=jax.ShapeDtypeStruct((B, S, D), jnp.float32),
        grid=(B, S // tq, H // ch),
        in_specs=[
            pl.BlockSpec((1, tq, D), lambda b, q, h: (b, q, 0)),   # y
            _const_spec((1, D)), _const_spec((1, D)),              # ln2 w, b
            pl.BlockSpec((D, ch), lambda b, q, h: (0, h)),         # w1 [in, out] chunk
            pl.BlockSpec((1, ch), lambda b, q, h: (0, h)),         # b1 chunk
            pl.BlockSpec((ch, D), lambda b, q, h: (h, 0)),         # w2 [in, out] chunk
            _const_spec((1, D)),                                   # b2
            _const_spec((1, D)), _const_spec((1, D)),              # final LN w, b
        ],
        out_specs=pl.BlockSpec((1, tq, D), lambda b, q, h: (b, q, 0)),
        scratch_shapes=[
            pltpu.VMEM((tq, D), MM_DTYPE),       # LN2(y), reused across H chunks
            pltpu.VMEM((tq, D), jnp.float32),    # f32 accumulator (residual + FFN)
        ],
        compiler_params=pltpu.CompilerParams(
            dimension_semantics=("parallel", "parallel", "arbitrary"),
            vmem_limit_bytes=VMEM_LIMIT),
    )(y, p["ln2w"], p["ln2b"], p["w1_t"], p["b1"], p["w2_t"], p["b2"],
      final_ln["w"], final_ln["b"])


# --------------------------------------------------------------------------- #
# full encoder
# --------------------------------------------------------------------------- #
def transformer_encoder(x, layer_params, final_ln, num_heads):
    n = len(layer_params)
    for i, p in enumerate(layer_params):
        y = attention_block(x, p, num_heads)
        x = ffn_block(y, p, final_ln, apply_final_ln=(i == n - 1))
    return x


def init_params(key, d_model, d_hidden, num_layers):
    # Layout relative to nn.TransformerEncoderLayer (pre-transposed, [in, out]):
    #   wqkv_t[i] = in_proj_weight[i*D:(i+1)*D, :].T   (i = 0:q, 1:k, 2:v)
    #   wo_t      = self_attn.out_proj.weight.T
    #   w1_t/w2_t = linear1.weight.T / linear2.weight.T
    # Matmul weights are stored in MM_DTYPE (bf16): full-rate MXU, half the
    # weight DMA bytes.  Biases / LayerNorm params stay f32.
    layers = []
    for _ in range(num_layers):
        key, k1, k2, k3, k4 = jax.random.split(key, 5)
        scale = 0.02
        layers.append(dict(
            wqkv_t=(scale * jax.random.normal(k1, (3, d_model, d_model),
                                              jnp.float32)).astype(MM_DTYPE),
            bqkv=jnp.zeros((3, 1, d_model), jnp.float32),
            wo_t=(scale * jax.random.normal(k2, (d_model, d_model),
                                            jnp.float32)).astype(MM_DTYPE),
            bo=jnp.zeros((1, d_model), jnp.float32),
            ln1w=jnp.ones((1, d_model), jnp.float32),
            ln1b=jnp.zeros((1, d_model), jnp.float32),
            ln2w=jnp.ones((1, d_model), jnp.float32),
            ln2b=jnp.zeros((1, d_model), jnp.float32),
            w1_t=(scale * jax.random.normal(k3, (d_model, d_hidden),
                                            jnp.float32)).astype(MM_DTYPE),
            b1=jnp.zeros((1, d_hidden), jnp.float32),
            w2_t=(scale * jax.random.normal(k4, (d_hidden, d_model),
                                            jnp.float32)).astype(MM_DTYPE),
            b2=jnp.zeros((1, d_model), jnp.float32),
        ))
    final_ln = dict(w=jnp.ones((1, d_model), jnp.float32),
                    b=jnp.zeros((1, d_model), jnp.float32))
    return layers, final_ln


if __name__ == "__main__":
    # Small shapes consistent with the module's forward: [batch, seq, d_model].
    # (Note: with d_model=32 the output lane dim is < 128, so stores are masked;
    #  production d_model that is a multiple of 128 gets lane-dense stores.)
    batch, seq, d_model = 2, 8, 32
    num_heads, d_hidden, num_layers = 4, 64, 2

    key = jax.random.PRNGKey(0)
    k_x, k_p = jax.random.split(key)
    x = jax.random.normal(k_x, (batch, seq, d_model), jnp.float32)
    layer_params, final_ln = init_params(k_p, d_model, d_hidden, num_layers)

    out = transformer_encoder(x, layer_params, final_ln, num_heads)
    out = jax.block_until_ready(out)
    assert out.shape == (batch, seq, d_model)
    assert bool(jnp.all(jnp.isfinite(out)))
    print("KERNEL_OK")
</pallas_src>

<mosaic_0001>
module attributes {stable_mosaic.version = 11 : i64} {
  func.func @attn_kernel(%arg0: i32, %arg1: i32, %arg2: memref<1x8x32xf32, #tpu.memory_space<vmem>>, %arg3: memref<1x8x32xf32, #tpu.memory_space<vmem>>, %arg4: memref<3x32x32xbf16, #tpu.memory_space<vmem>>, %arg5: memref<3x1x32xf32, #tpu.memory_space<vmem>>, %arg6: memref<32x32xbf16, #tpu.memory_space<vmem>>, %arg7: memref<1x32xf32, #tpu.memory_space<vmem>>, %arg8: memref<1x32xf32, #tpu.memory_space<vmem>>, %arg9: memref<1x32xf32, #tpu.memory_space<vmem>>, %arg10: memref<1x8x32xf32, #tpu.memory_space<vmem>>, %arg11: memref<4x8x8xbf16, #tpu.memory_space<vmem>>, %arg12: memref<4x8x8xbf16, #tpu.memory_space<vmem>>) attributes {dimension_semantics = [#tpu.dimension_semantics<parallel>, #tpu.dimension_semantics<arbitrary>], iteration_bounds = array<i64: 2, 1>, scalar_prefetch = 0 : i64, scratch_operands = 2 : i64, tpu.core_type = #tpu.core_type<tc>, window_params = [{transform_indices = @transform_0, window_bounds = array<i64: 1, 8, 32>}, {transform_indices = @transform_1, window_bounds = array<i64: 1, 8, 32>}, {pipeline_mode = #tpu.pipeline_mode<synchronous>, transform_indices = @transform_2, window_bounds = array<i64: 3, 32, 32>}, {pipeline_mode = #tpu.pipeline_mode<synchronous>, transform_indices = @transform_3, window_bounds = array<i64: 3, 1, 32>}, {pipeline_mode = #tpu.pipeline_mode<synchronous>, transform_indices = @transform_4, window_bounds = array<i64: 32, 32>}, {pipeline_mode = #tpu.pipeline_mode<synchronous>, transform_indices = @transform_5, window_bounds = array<i64: 1, 32>}, {pipeline_mode = #tpu.pipeline_mode<synchronous>, transform_indices = @transform_6, window_bounds = array<i64: 1, 32>}, {pipeline_mode = #tpu.pipeline_mode<synchronous>, transform_indices = @transform_7, window_bounds = array<i64: 1, 32>}, {transform_indices = @transform_8, window_bounds = array<i64: 1, 8, 32>}]} {
    %c0_i32 = arith.constant 0 : i32
    %0 = arith.cmpi eq, %arg1, %c0_i32 : i32
    %1 = arith.extui %0 : i1 to i32
    %c0_i32_0 = arith.constant 0 : i32
    %2 = arith.cmpi ne, %1, %c0_i32_0 : i32
    scf.if %2 {
      %c0_40 = arith.constant 0 : index
      %c0_41 = arith.constant 0 : index
      %c0_42 = arith.constant 0 : index
      %84 = vector.load %arg3[%c0_40, %c0_41, %c0_42] : memref<1x8x32xf32, #tpu.memory_space<vmem>>, vector<1x8x32xf32>
      %85 = vector.shape_cast %84 : vector<1x8x32xf32> to vector<8x32xf32>
      %c0_43 = arith.constant 0 : index
      %c0_44 = arith.constant 0 : index
      %86 = vector.load %arg8[%c0_43, %c0_44] : memref<1x32xf32, #tpu.memory_space<vmem>>, vector<1x32xf32>
      %87 = vector.shape_cast %86 : vector<1x32xf32> to vector<32xf32>
      %c0_45 = arith.constant 0 : index
      %c0_46 = arith.constant 0 : index
      %88 = vector.load %arg9[%c0_45, %c0_46] : memref<1x32xf32, #tpu.memory_space<vmem>>, vector<1x32xf32>
      %89 = vector.shape_cast %88 : vector<1x32xf32> to vector<32xf32>
      %cst_47 = arith.constant dense<0.000000e+00> : vector<8xf32>
      %90 = vector.multi_reduction <add>, %85, %cst_47 [1] : vector<8x32xf32> to vector<8xf32>
      %91 = vector.shape_cast %90 : vector<8xf32> to vector<8x1xf32>
      %cst_48 = arith.constant 3.200000e+01 : f32
      %92 = vector.broadcast %cst_48 : f32 to vector<8x1xf32>
      %93 = arith.divf %91, %92 : vector<8x1xf32>
      %94 = vector.broadcast %93 : vector<8x1xf32> to vector<8x32xf32>
      %95 = arith.subf %85, %94 : vector<8x32xf32>
      %96 = arith.mulf %95, %95 : vector<8x32xf32>
      %cst_49 = arith.constant dense<0.000000e+00> : vector<8xf32>
      %97 = vector.multi_reduction <add>, %96, %cst_49 [1] : vector<8x32xf32> to vector<8xf32>
      %98 = vector.shape_cast %97 : vector<8xf32> to vector<8x1xf32>
      %cst_50 = arith.constant 3.200000e+01 : f32
      %99 = vector.broadcast %cst_50 : f32 to vector<8x1xf32>
      %100 = arith.divf %98, %99 : vector<8x1xf32>
      %cst_51 = arith.constant 9.99999974E-6 : f32
      %101 = vector.broadcast %cst_51 : f32 to vector<8x1xf32>
      %102 = arith.addf %100, %101 : vector<8x1xf32>
      %103 = math.rsqrt %102 : vector<8x1xf32>
      %104 = vector.broadcast %103 : vector<8x1xf32> to vector<8x32xf32>
      %105 = arith.mulf %95, %104 : vector<8x32xf32>
      %106 = vector.shape_cast %87 : vector<32xf32> to vector<1x32xf32>
      %107 = vector.broadcast %106 : vector<1x32xf32> to vector<8x32xf32>
      %108 = arith.mulf %105, %107 : vector<8x32xf32>
      %109 = vector.shape_cast %89 : vector<32xf32> to vector<1x32xf32>
      %110 = vector.broadcast %109 : vector<1x32xf32> to vector<8x32xf32>
      %111 = arith.addf %108, %110 : vector<8x32xf32>
      %112 = arith.truncf %111 : vector<8x32xf32> to vector<8x32xbf16>
      %c1 = arith.constant 1 : index
      %c0_52 = arith.constant 0 : index
      %c0_53 = arith.constant 0 : index
      %113 = vector.load %arg4[%c1, %c0_52, %c0_53] : memref<3x32x32xbf16, #tpu.memory_space<vmem>>, vector<1x32x32xbf16>
      %114 = vector.shape_cast %113 : vector<1x32x32xbf16> to vector<32x32xbf16>
      %cst_54 = arith.constant dense<0.000000e+00> : vector<8x32xf32>
      %115 = tpu.matmul %112, %114, %cst_54 {dimension_numbers = #tpu.dot_dimension_numbers<[1], [0], [0], [1], [0, 0, 1, 1], [], []>} : vector<8x32xbf16>, vector<32x32xbf16>, vector<8x32xf32> -> vector<8x32xf32>
      %c1_55 = arith.constant 1 : index
      %c0_56 = arith.constant 0 : index
      %c0_57 = arith.constant 0 : index
      %116 = vector.load %arg5[%c1_55, %c0_56, %c0_57] : memref<3x1x32xf32, #tpu.memory_space<vmem>>, vector<1x1x32xf32>
      %117 = vector.shape_cast %116 : vector<1x1x32xf32> to vector<1x32xf32>
      %118 = vector.broadcast %117 : vector<1x32xf32> to vector<8x32xf32>
      %119 = arith.addf %115, %118 : vector<8x32xf32>
      %c2 = arith.constant 2 : index
      %c0_58 = arith.constant 0 : index
      %c0_59 = arith.constant 0 : index
      %120 = vector.load %arg4[%c2, %c0_58, %c0_59] : memref<3x32x32xbf16, #tpu.memory_space<vmem>>, vector<1x32x32xbf16>
      %121 = vector.shape_cast %120 : vector<1x32x32xbf16> to vector<32x32xbf16>
      %cst_60 = arith.constant dense<0.000000e+00> : vector<8x32xf32>
      %122 = tpu.matmul %112, %121, %cst_60 {dimension_numbers = #tpu.dot_dimension_numbers<[1], [0], [0], [1], [0, 0, 1, 1], [], []>} : vector<8x32xbf16>, vector<32x32xbf16>, vector<8x32xf32> -> vector<8x32xf32>
      %c2_61 = arith.constant 2 : index
      %c0_62 = arith.constant 0 : index
      %c0_63 = arith.constant 0 : index
      %123 = vector.load %arg5[%c2_61, %c0_62, %c0_63] : memref<3x1x32xf32, #tpu.memory_space<vmem>>, vector<1x1x32xf32>
      %124 = vector.shape_cast %123 : vector<1x1x32xf32> to vector<1x32xf32>
      %125 = vector.broadcast %124 : vector<1x32xf32> to vector<8x32xf32>
      %126 = arith.addf %122, %125 : vector<8x32xf32>
      %127 = vector.shape_cast %119 : vector<8x32xf32> to vector<8x4x8xf32>
      %128 = tpu.transpose %127, [1, 0, 2] : vector<8x4x8xf32> -> vector<4x8x8xf32>
      %129 = arith.truncf %128 : vector<4x8x8xf32> to vector<4x8x8xbf16>
      %c0_64 = arith.constant 0 : index
      %c0_65 = arith.constant 0 : index
      %c0_66 = arith.constant 0 : index
      %130 = vector.load %arg11[%c0_64, %c0_65, %c0_66] : memref<4x8x8xbf16, #tpu.memory_space<vmem>>, vector<4x8x8xbf16>
      tpu.vector_store %arg11[%c0_64, %c0_65, %c0_66], %129 {strides = array<i32>} : memref<4x8x8xbf16, #tpu.memory_space<vmem>>, vector<4x8x8xbf16>,
      %131 = vector.shape_cast %126 : vector<8x32xf32> to vector<8x4x8xf32>
      %132 = tpu.transpose %131, [1, 0, 2] : vector<8x4x8xf32> -> vector<4x8x8xf32>
      %133 = arith.truncf %132 : vector<4x8x8xf32> to vector<4x8x8xbf16>
      %c0_67 = arith.constant 0 : index
      %c0_68 = arith.constant 0 : index
      %c0_69 = arith.constant 0 : index
      %134 = vector.load %arg12[%c0_67, %c0_68, %c0_69] : memref<4x8x8xbf16, #tpu.memory_space<vmem>>, vector<4x8x8xbf16>
      tpu.vector_store %arg12[%c0_67, %c0_68, %c0_69], %133 {strides = array<i32>} : memref<4x8x8xbf16, #tpu.memory_space<vmem>>, vector<4x8x8xbf16>,
    } else {
    }
    %c0 = arith.constant 0 : index
    %c0_1 = arith.constant 0 : index
    %c0_2 = arith.constant 0 : index
    %3 = vector.load %arg2[%c0, %c0_1, %c0_2] : memref<1x8x32xf32, #tpu.memory_space<vmem>>, vector<1x8x32xf32>
    %4 = vector.shape_cast %3 : vector<1x8x32xf32> to vector<8x32xf32>
    %c0_3 = arith.constant 0 : index
    %c0_4 = arith.constant 0 : index
    %5 = vector.load %arg8[%c0_3, %c0_4] : memref<1x32xf32, #tpu.memory_space<vmem>>, vector<1x32xf32>
    %6 = vector.shape_cast %5 : vector<1x32xf32> to vector<32xf32>
    %c0_5 = arith.constant 0 : index
    %c0_6 = arith.constant 0 : index
    %7 = vector.load %arg9[%c0_5, %c0_6] : memref<1x32xf32, #tpu.memory_space<vmem>>, vector<1x32xf32>
    %8 = vector.shape_cast %7 : vector<1x32xf32> to vector<32xf32>
    %cst = arith.constant dense<0.000000e+00> : vector<8xf32>
    %9 = vector.multi_reduction <add>, %4, %cst [1] : vector<8x32xf32> to vector<8xf32>
    %10 = vector.shape_cast %9 : vector<8xf32> to vector<8x1xf32>
    %cst_7 = arith.constant 3.200000e+01 : f32
    %11 = vector.broadcast %cst_7 : f32 to vector<8x1xf32>
    %12 = arith.divf %10, %11 : vector<8x1xf32>
    %13 = vector.broadcast %12 : vector<8x1xf32> to vector<8x32xf32>
    %14 = arith.subf %4, %13 : vector<8x32xf32>
    %15 = arith.mulf %14, %14 : vector<8x32xf32>
    %cst_8 = arith.constant dense<0.000000e+00> : vector<8xf32>
    %16 = vector.multi_reduction <add>, %15, %cst_8 [1] : vector<8x32xf32> to vector<8xf32>
    %17 = vector.shape_cast %16 : vector<8xf32> to vector<8x1xf32>
    %cst_9 = arith.constant 3.200000e+01 : f32
    %18 = vector.broadcast %cst_9 : f32 to vector<8x1xf32>
    %19 = arith.divf %17, %18 : vector<8x1xf32>
    %cst_10 = arith.constant 9.99999974E-6 : f32
    %20 = vector.broadcast %cst_10 : f32 to vector<8x1xf32>
    %21 = arith.addf %19, %20 : vector<8x1xf32>
    %22 = math.rsqrt %21 : vector<8x1xf32>
    %23 = vector.broadcast %22 : vector<8x1xf32> to vector<8x32xf32>
    %24 = arith.mulf %14, %23 : vector<8x32xf32>
    %25 = vector.shape_cast %6 : vector<32xf32> to vector<1x32xf32>
    %26 = vector.broadcast %25 : vector<1x32xf32> to vector<8x32xf32>
    %27 = arith.mulf %24, %26 : vector<8x32xf32>
    %28 = vector.shape_cast %8 : vector<32xf32> to vector<1x32xf32>
    %29 = vector.broadcast %28 : vector<1x32xf32> to vector<8x32xf32>
    %30 = arith.addf %27, %29 : vector<8x32xf32>
    %31 = arith.truncf %30 : vector<8x32xf32> to vector<8x32xbf16>
    %c0_11 = arith.constant 0 : index
    %c0_12 = arith.constant 0 : index
    %c0_13 = arith.constant 0 : index
    %32 = vector.load %arg4[%c0_11, %c0_12, %c0_13] : memref<3x32x32xbf16, #tpu.memory_space<vmem>>, vector<1x32x32xbf16>
    %33 = vector.shape_cast %32 : vector<1x32x32xbf16> to vector<32x32xbf16>
    %cst_14 = arith.constant dense<0.000000e+00> : vector<8x32xf32>
    %34 = tpu.matmul %31, %33, %cst_14 {dimension_numbers = #tpu.dot_dimension_numbers<[1], [0], [0], [1], [0, 0, 1, 1], [], []>} : vector<8x32xbf16>, vector<32x32xbf16>, vector<8x32xf32> -> vector<8x32xf32>
    %c0_15 = arith.constant 0 : index
    %c0_16 = arith.constant 0 : index
    %c0_17 = arith.constant 0 : index
    %35 = vector.load %arg5[%c0_15, %c0_16, %c0_17] : memref<3x1x32xf32, #tpu.memory_space<vmem>>, vector<1x1x32xf32>
    %36 = vector.shape_cast %35 : vector<1x1x32xf32> to vector<1x32xf32>
    %37 = vector.broadcast %36 : vector<1x32xf32> to vector<8x32xf32>
    %38 = arith.addf %34, %37 : vector<8x32xf32>
    %cst_18 = arith.constant 0.353553385 : f32
    %39 = vector.broadcast %cst_18 : f32 to vector<8x32xf32>
    %40 = arith.mulf %38, %39 : vector<8x32xf32>
    %41 = vector.shape_cast %40 : vector<8x32xf32> to vector<8x4x8xf32>
    %42 = tpu.transpose %41, [1, 0, 2] : vector<8x4x8xf32> -> vector<4x8x8xf32>
    %43 = arith.truncf %42 : vector<4x8x8xf32> to vector<4x8x8xbf16>
    %cst_19 = arith.constant 0xFF800000 : f32
    %44 = vector.broadcast %cst_19 : f32 to vector<4x8x1xf32>
    %cst_20 = arith.constant 0.000000e+00 : f32
    %45 = vector.broadcast %cst_20 : f32 to vector<4x8x1xf32>
    %cst_21 = arith.constant 0.000000e+00 : f32
    %46 = vector.broadcast %cst_21 : f32 to vector<4x8x8xf32>
    %c0_22 = arith.constant 0 : index
    %c0_23 = arith.constant 0 : index
    %c0_24 = arith.constant 0 : index
    %47 = vector.load %arg11[%c0_22, %c0_23, %c0_24] : memref<4x8x8xbf16, #tpu.memory_space<vmem>>, vector<4x8x8xbf16>
    %c0_25 = arith.constant 0 : index
    %c0_26 = arith.constant 0 : index
    %c0_27 = arith.constant 0 : index
    %48 = vector.load %arg12[%c0_25, %c0_26, %c0_27] : memref<4x8x8xbf16, #tpu.memory_space<vmem>>, vector<4x8x8xbf16>
    "tpu.trace_start"() <{level = 10 : i32, message = "hqd,hkd->hqk"}> : () -> ()
    %cst_28 = arith.constant dense<0.000000e+00> : vector<4x8x8xf32>
    %49 = tpu.matmul %43, %47, %cst_28 {dimension_numbers = #tpu.dot_dimension_numbers<[2], [2], [1], [1], [0, 0, 0, 1, 1, 1], [0], [0]>} : vector<4x8x8xbf16>, vector<4x8x8xbf16>, vector<4x8x8xf32> -> vector<4x8x8xf32>
    "tpu.trace_stop"() : () -> ()
    %cst_29 = arith.constant dense<0xFF800000> : vector<4x8xf32>
    %50 = vector.multi_reduction <maximumf>, %49, %cst_29 [2] : vector<4x8x8xf32> to vector<4x8xf32>
    %51 = vector.shape_cast %50 : vector<4x8xf32> to vector<4x8x1xf32>
    %52 = arith.maximumf %44, %51 : vector<4x8x1xf32>
    %53 = arith.subf %44, %52 : vector<4x8x1xf32>
    %54 = math.exp %53 : vector<4x8x1xf32>
    %55 = vector.broadcast %52 : vector<4x8x1xf32> to vector<4x8x8xf32>
    %56 = arith.subf %49, %55 : vector<4x8x8xf32>
    %57 = math.exp %56 : vector<4x8x8xf32>
    %58 = arith.mulf %54, %45 : vector<4x8x1xf32>
    %cst_30 = arith.constant dense<0.000000e+00> : vector<4x8xf32>
    %59 = vector.multi_reduction <add>, %57, %cst_30 [2] : vector<4x8x8xf32> to vector<4x8xf32>
    %60 = vector.shape_cast %59 : vector<4x8xf32> to vector<4x8x1xf32>
    %61 = arith.addf %58, %60 : vector<4x8x1xf32>
    %62 = vector.broadcast %54 : vector<4x8x1xf32> to vector<4x8x8xf32>
    %63 = arith.mulf %62, %46 : vector<4x8x8xf32>
    %64 = arith.truncf %57 : vector<4x8x8xf32> to vector<4x8x8xbf16>
    "tpu.trace_start"() <{level = 10 : i32, message = "hqk,hkd->hqd"}> : () -> ()
    %cst_31 = arith.constant dense<0.000000e+00> : vector<4x8x8xf32>
    %65 = tpu.matmul %64, %48, %cst_31 {dimension_numbers = #tpu.dot_dimension_numbers<[2], [1], [1], [2], [0, 0, 0, 1, 1, 2], [0], [0]>} : vector<4x8x8xbf16>, vector<4x8x8xbf16>, vector<4x8x8xf32> -> vector<4x8x8xf32>
    "tpu.trace_stop"() : () -> ()
    %66 = arith.addf %63, %65 : vector<4x8x8xf32>
    %67 = tpu.reciprocal %61 {approx = true} : vector<4x8x1xf32> -> vector<4x8x1xf32>
    %68 = vector.broadcast %67 : vector<4x8x1xf32> to vector<4x8x8xf32>
    %69 = arith.mulf %66, %68 : vector<4x8x8xf32>
    %70 = tpu.transpose %69, [1, 0, 2] : vector<4x8x8xf32> -> vector<8x4x8xf32>
    %71 = vector.shape_cast %70 : vector<8x4x8xf32> to vector<8x32xf32>
    %72 = arith.truncf %71 : vector<8x32xf32> to vector<8x32xbf16>
    %c0_32 = arith.constant 0 : index
    %c0_33 = arith.constant 0 : index
    %73 = vector.load %arg6[%c0_32, %c0_33] : memref<32x32xbf16, #tpu.memory_space<vmem>>, vector<32x32xbf16>
    %cst_34 = arith.constant dense<0.000000e+00> : vector<8x32xf32>
    %74 = tpu.matmul %72, %73, %cst_34 {dimension_numbers = #tpu.dot_dimension_numbers<[1], [0], [0], [1], [0, 0, 1, 1], [], []>} : vector<8x32xbf16>, vector<32x32xbf16>, vector<8x32xf32> -> vector<8x32xf32>
    %c0_35 = arith.constant 0 : index
    %c0_36 = arith.constant 0 : index
    %75 = vector.load %arg7[%c0_35, %c0_36] : memref<1x32xf32, #tpu.memory_space<vmem>>, vector<1x32xf32>
    %76 = vector.shape_cast %75 : vector<1x32xf32> to vector<32xf32>
    %77 = vector.shape_cast %76 : vector<32xf32> to vector<1x32xf32>
    %78 = vector.broadcast %77 : vector<1x32xf32> to vector<8x32xf32>
    %79 = arith.addf %74, %78 : vector<8x32xf32>
    %80 = arith.addf %4, %79 : vector<8x32xf32>
    %c0_37 = arith.constant 0 : index
    %c0_38 = arith.constant 0 : index
    %c0_39 = arith.constant 0 : index
    %81 = vector.load %arg10[%c0_37, %c0_38, %c0_39] : memref<1x8x32xf32, #tpu.memory_space<vmem>>, vector<1x8x32xf32>
    %82 = vector.shape_cast %81 : vector<1x8x32xf32> to vector<8x32xf32>
    %83 = vector.shape_cast %80 : vector<8x32xf32> to vector<1x8x32xf32>
    tpu.vector_store %arg10[%c0_37, %c0_38, %c0_39], %83 {strides = array<i32>} : memref<1x8x32xf32, #tpu.memory_space<vmem>>, vector<1x8x32xf32>,
    return
  }
  func.func @transform_0(%arg0: i32, %arg1: i32) -> (i32, i32, i32) {
    %c0_i32 = arith.constant 0 : i32
    %c0_i32_0 = arith.constant 0 : i32
    return %arg0, %arg1, %c0_i32 : i32, i32, i32
  }
  func.func @transform_1(%arg0: i32, %arg1: i32) -> (i32, i32, i32) {
    %c0_i32 = arith.constant 0 : i32
    %c0_i32_0 = arith.constant 0 : i32
    %c0_i32_1 = arith.constant 0 : i32
    return %arg0, %c0_i32, %c0_i32_0 : i32, i32, i32
  }
  func.func @transform_2(%arg0: i32, %arg1: i32) -> (i32, i32, i32) {
    %c0_i32 = arith.constant 0 : i32
    %c0_i32_0 = arith.constant 0 : i32
    %c0_i32_1 = arith.constant 0 : i32
    %c0_i32_2 = arith.constant 0 : i32
    return %c0_i32, %c0_i32_0, %c0_i32_1 : i32, i32, i32
  }
  func.func @transform_3(%arg0: i32, %arg1: i32) -> (i32, i32, i32) {
    %c0_i32 = arith.constant 0 : i32
    %c0_i32_0 = arith.constant 0 : i32
    %c0_i32_1 = arith.constant 0 : i32
    %c0_i32_2 = arith.constant 0 : i32
    return %c0_i32, %c0_i32_0, %c0_i32_1 : i32, i32, i32
  }
  func.func @transform_4(%arg0: i32, %arg1: i32) -> (i32, i32) {
    %c0_i32 = arith.constant 0 : i32
    %c0_i32_0 = arith.constant 0 : i32
    %c0_i32_1 = arith.constant 0 : i32
    return %c0_i32, %c0_i32_0 : i32, i32
  }
  func.func @transform_5(%arg0: i32, %arg1: i32) -> (i32, i32) {
    %c0_i32 = arith.constant 0 : i32
    %c0_i32_0 = arith.constant 0 : i32
    %c0_i32_1 = arith.constant 0 : i32
    return %c0_i32, %c0_i32_0 : i32, i32
  }
  func.func @transform_6(%arg0: i32, %arg1: i32) -> (i32, i32) {
    %c0_i32 = arith.constant 0 : i32
    %c0_i32_0 = arith.constant 0 : i32
    %c0_i32_1 = arith.constant 0 : i32
    return %c0_i32, %c0_i32_0 : i32, i32
  }
  func.func @transform_7(%arg0: i32, %arg1: i32) -> (i32, i32) {
    %c0_i32 = arith.constant 0 : i32
    %c0_i32_0 = arith.constant 0 : i32
    %c0_i32_1 = arith.constant 0 : i32
    return %c0_i32, %c0_i32_0 : i32, i32
  }
  func.func @transform_8(%arg0: i32, %arg1: i32) -> (i32, i32, i32) {
    %c0_i32 = arith.constant 0 : i32
    %c0_i32_0 = arith.constant 0 : i32
    return %arg0, %arg1, %c0_i32 : i32, i32, i32
  }
}

</mosaic_0001>

<llo_original>
// kernel: tpu_custom_call.1
$region0: #{tpu_custom_call.1}
  #allocation0 [shape = 'u32[]', space=smem, size = 0x4, offset = 0x4, fixed_abs, tag = 'smem constant byte address 0x4 - core index']
  #allocation1 [shape = 'u32[144,128]{1,0:T(1,128)}', space=vmem, size = 0x12000, scoped, tag = 'internal scratch']
  #allocation2 [shape = 'bf16[4,8,8]{2,1,0:T(8,128)(2,1)}', space=vmem, size = 0x2000, scoped, tag = 'scratch operand']
  #allocation3 [shape = 'bf16[4,8,8]{2,1,0:T(8,128)(2,1)}', space=vmem, size = 0x2000, scoped, tag = 'scratch operand']
  %s0 = inlined_call_operand.hbm [shape: f32[2,8,32], index: 0, kind: input, shape index: {}]
  %s1 = inlined_call_operand.hbm [shape: f32[2,8,32], index: 1, kind: input, shape index: {}]
  %s2 = inlined_call_operand.hbm [shape: bf16[3,32,32], index: 2, kind: input, shape index: {}]
  %s3 = inlined_call_operand.vmem [shape: f32[3,1,32], index: 3, kind: input, shape index: {}]
  %s4 = inlined_call_operand.hbm [shape: bf16[32,32], index: 4, kind: input, shape index: {}]
  %s5 = inlined_call_operand.vmem [shape: f32[1,32], index: 5, kind: input, shape index: {}]
  %s6 = inlined_call_operand.vmem [shape: f32[1,32], index: 6, kind: input, shape index: {}]
  %s7 = inlined_call_operand.vmem [shape: f32[1,32], index: 7, kind: input, shape index: {}]
  %s8 = inlined_call_operand.hbm [shape: f32[2,8,32], index: 8, kind: output, shape index: {}]
  %s9 = sld [smem:[#allocation0]]
  $region85: #{tpu_custom_call.1} parent=0
    _
  %s11 = ssub.s32 1, %s9
  %s12 = scalar_select 0, %s11, %s9
  $region1: #{tpu_custom_call.1} parent=0
    #allocation4 [shape = 'u8[8192]{0}', space=vmem, size = 0x2000, scoped, tag = 'input window, operand 0']
    #allocation5 [shape = 's32[2]{0}', space=sflag, size = 0x8, scoped, tag = 'scoped memory for tpu_custom_call.1']
    #allocation6 [shape = 's32[2]{0}', space=sflag, size = 0x8, scoped, tag = 'scoped memory for tpu_custom_call.1']
    #allocation7 [shape = 'u8[8192]{0}', space=vmem, size = 0x2000, scoped, tag = 'input window, operand 1']
    #allocation8 [shape = 's32[2]{0}', space=sflag, size = 0x8, scoped, tag = 'scoped memory for tpu_custom_call.1']
    #allocation9 [shape = 'u8[24576]{0}', space=vmem, size = 0x6000, scoped, tag = 'input window, operand 2, single buffered']
    #allocation10 [shape = 'u8[8192]{0}', space=vmem, size = 0x2000, scoped, tag = 'input window, operand 4, single buffered']
    #allocation11 [shape = 's32[1]{0}', space=sflag, size = 0x4, scoped, tag = 'scoped memory for tpu_custom_call.1']
    #allocation12 [shape = 'u8[8192]{0}', space=vmem, size = 0x2000, scoped, tag = 'output window, operand 0']
    %13 = vsyncpa [#allocation5], 0
    %s14 = scalar_lea.sflag [#allocation5], 1
    %15 = vsyncpa %s14, 0
    %16 = vsyncpa [#allocation8], 0
    %s17 = scalar_lea.sflag [#allocation8], 1
    %18 = vsyncpa %s17, 0
    %19 = vsyncpa [#allocation11], 0
    %20 = vsyncpa [#allocation6], 0
    %s21 = scalar_lea.sflag [#allocation6], 1
    %22 = vsyncpa %s21, 0
    loop: start=0, step=1, limit=4
    $region2: #{tpu_custom_call.1} parent=1 // loop_pre_header
      _
    $region3: #{tpu_custom_call.1} parent=1 // loop_header
      %s24 = sphi 0, %s28
      %p25 = scmp.ge.s32.totalorder %s24, 4
      %s31 = sphi 0, %s43
      %s32 = sphi 0, %s39
      %s33 = sphi 0, %s31
      %s34 = sphi 0, %s32
      %s35 = sphi 0, %s33
      %s36 = sphi 0, %s34
      %s48 = sphi 0, %s50
      %s51 = sphi 0, %s48
      %s52 = sphi 0, %s51
      %s68 = sphi 0, %s52
      %s74 = sphi 0, %s76
      %s77 = sphi 0, %s74
      %s78 = sphi 0, %s77
      %s94 = sphi 0, %s78
      %s98 = sphi 0, %s98
      %s100 = sphi 0, %s98
      %s101 = sphi 0, %s100
      %s115 = sphi 0, %s101
      %s119 = sphi 0, %s119
      %s121 = sphi 0, %s119
      %s122 = sphi 0, %s121
      %s136 = sphi 0, %s122
      %s140 = sphi 0, %s140
      %s142 = sphi 0, %s140
      %s143 = sphi 0, %s142
      %s157 = sphi 0, %s143
      %s161 = sphi 0, %s161
      %s163 = sphi 0, %s161
      %s164 = sphi 0, %s163
      %s178 = sphi 0, %s164
      %s182 = sphi 0, %s182
      %s184 = sphi 0, %s182
      %s185 = sphi 0, %s184
      %s199 = sphi 0, %s185
      %s203 = sphi 0, %s203
      %s205 = sphi 0, %s203
      %s206 = sphi 0, %s205
      %s220 = sphi 0, %s206
      %s228 = sphi 0, %s230
      %s231 = sphi 0, %s228
      %s232 = sphi 0, %s231
      %s248 = sphi 0, %s232
    $region4: #{tpu_custom_call.1} parent=1 // loop_header_branch
      %27 = sbr.rel (%p25) target = $region8
    $region5: #{tpu_custom_call.1} parent=1 // loop_body
      %s29 = ssub.s32 %s24, 1
      %s30 = ssub.s32 %s24, 2
      %s37 = sadd.s32 1, %s32
      %p38 = scmp.ge.s32.totalorder %s37, 1
      %s39 = scalar_select %p38, 0, %s37
      %s40 = sadd.s32 1, %s31
      %s41 = scalar_select %p38, %s40, %s31
      %p42 = scmp.ge.s32.totalorder %s41, 2
      %s43 = scalar_select %p42, 0, %s41
      %s44 = ssub.s32 %s31, %s43
      %s45 = ssub.s32 %s32, %s39
      %s46 = sor.u32 %s44, %s45
      %p47 = scmp.eq.s32.totalorder %s46, 0
      %s49 = sadd.s32 %s48, 1
      %s50 = scalar_select %p47, %s48, %s49
      %p53 = pneg %p47
      %p54 = scmp.eq.s32.totalorder %s24, 1
      %p55 = por %p53, %p54
      %p56 = scmp.ne.s32.totalorder %s48, %s51
      %p57 = scmp.eq.s32.totalorder %s24, 0
      %p58 = por %p56, %p57
      %p59 = scmp.ne.s32.totalorder %s48, %s51
      %p60 = scmp.eq.s32.totalorder %s29, 1
      %p61 = por %p59, %p60
      %p62 = scmp.ne.s32.totalorder %s51, %s52
      %p63 = scmp.eq.s32.totalorder %s29, 0
      %p64 = por %p62, %p63
      %p65 = scmp.ne.s32.totalorder %s51, %s52
      %p66 = scmp.eq.s32.totalorder %s30, 1
      %p67 = por %p65, %p66
      %p69 = scmp.ne.s32.totalorder %s52, %s68
      %p70 = scmp.eq.s32.totalorder %s30, 0
      %p71 = por %p69, %p70
      %s72 = ssub.s32 %s31, %s43
      %p73 = scmp.eq.s32.totalorder %s72, 0
      %s75 = sadd.s32 %s74, 1
      %s76 = scalar_select %p73, %s74, %s75
      %p79 = pneg %p73
      %p80 = scmp.eq.s32.totalorder %s24, 1
      %p81 = por %p79, %p80
      %p82 = scmp.ne.s32.totalorder %s74, %s77
      %p83 = scmp.eq.s32.totalorder %s24, 0
      %p84 = por %p82, %p83
      %p85 = scmp.ne.s32.totalorder %s74, %s77
      %p86 = scmp.eq.s32.totalorder %s29, 1
      %p87 = por %p85, %p86
      %p88 = scmp.ne.s32.totalorder %s77, %s78
      %p89 = scmp.eq.s32.totalorder %s29, 0
      %p90 = por %p88, %p89
      %p91 = scmp.ne.s32.totalorder %s77, %s78
      %p92 = scmp.eq.s32.totalorder %s30, 1
      %p93 = por %p91, %p92
      %p95 = scmp.ne.s32.totalorder %s78, %s94
      %p96 = scmp.eq.s32.totalorder %s30, 0
      %p97 = por %p95, %p96
      %s99 = sadd.s32 %s98, 1
      %p102 = scmp.eq.s32.totalorder %s24, 1
      %p103 = scmp.ne.s32.totalorder %s98, %s100
      %p104 = scmp.eq.s32.totalorder %s24, 0
      %p105 = por %p103, %p104
      %p106 = scmp.ne.s32.totalorder %s98, %s100
      %p107 = scmp.eq.s32.totalorder %s29, 1
      %p108 = por %p106, %p107
      %p109 = scmp.ne.s32.totalorder %s100, %s101
      %p110 = scmp.eq.s32.totalorder %s29, 0
      %p111 = por %p109, %p110
      %p112 = scmp.ne.s32.totalorder %s100, %s101
      %p113 = scmp.eq.s32.totalorder %s30, 1
      %p114 = por %p112, %p113
      %p116 = scmp.ne.s32.totalorder %s101, %s115
      %p117 = scmp.eq.s32.totalorder %s30, 0
      %p118 = por %p116, %p117
      %s120 = sadd.s32 %s119, 1
      %p123 = scmp.eq.s32.totalorder %s24, 1
      %p124 = scmp.ne.s32.totalorder %s119, %s121
      %p125 = scmp.eq.s32.totalorder %s24, 0
      %p126 = por %p124, %p125
      %p127 = scmp.ne.s32.totalorder %s119, %s121
      %p128 = scmp.eq.s32.totalorder %s29, 1
      %p129 = por %p127, %p128
      %p130 = scmp.ne.s32.totalorder %s121, %s122
      %p131 = scmp.eq.s32.totalorder %s29, 0
      %p132 = por %p130, %p131
      %p133 = scmp.ne.s32.totalorder %s121, %s122
      %p134 = scmp.eq.s32.totalorder %s30, 1
      %p135 = por %p133, %p134
      %p137 = scmp.ne.s32.totalorder %s122, %s136
      %p138 = scmp.eq.s32.totalorder %s30, 0
      %p139 = por %p137, %p138
      %s141 = sadd.s32 %s140, 1
      %p144 = scmp.eq.s32.totalorder %s24, 1
      %p145 = scmp.ne.s32.totalorder %s140, %s142
      %p146 = scmp.eq.s32.totalorder %s24, 0
      %p147 = por %p145, %p146
      %p148 = scmp.ne.s32.totalorder %s140, %s142
      %p149 = scmp.eq.s32.totalorder %s29, 1
      %p150 = por %p148, %p149
      %p151 = scmp.ne.s32.totalorder %s142, %s143
      %p152 = scmp.eq.s32.totalorder %s29, 0
      %p153 = por %p151, %p152
      %p154 = scmp.ne.s32.totalorder %s142, %s143
      %p155 = scmp.eq.s32.totalorder %s30, 1
      %p156 = por %p154, %p155
      %p158 = scmp.ne.s32.totalorder %s143, %s157
      %p159 = scmp.eq.s32.totalorder %s30, 0
      %p160 = por %p158, %p159
      %s162 = sadd.s32 %s161, 1
      %p165 = scmp.eq.s32.totalorder %s24, 1
      %p166 = scmp.ne.s32.totalorder %s161, %s163
      %p167 = scmp.eq.s32.totalorder %s24, 0
      %p168 = por %p166, %p167
      %p169 = scmp.ne.s32.totalorder %s161, %s163
      %p170 = scmp.eq.s32.totalorder %s29, 1
      %p171 = por %p169, %p170
      %p172 = scmp.ne.s32.totalorder %s163, %s164
      %p173 = scmp.eq.s32.totalorder %s29, 0
      %p174 = por %p172, %p173
      %p175 = scmp.ne.s32.totalorder %s163, %s164
      %p176 = scmp.eq.s32.totalorder %s30, 1
      %p177 = por %p175, %p176
      %p179 = scmp.ne.s32.totalorder %s164, %s178
      %p180 = scmp.eq.s32.totalorder %s30, 0
      %p181 = por %p179, %p180
      %s183 = sadd.s32 %s182, 1
      %p186 = scmp.eq.s32.totalorder %s24, 1
      %p187 = scmp.ne.s32.totalorder %s182, %s184
      %p188 = scmp.eq.s32.totalorder %s24, 0
      %p189 = por %p187, %p188
      %p190 = scmp.ne.s32.totalorder %s182, %s184
      %p191 = scmp.eq.s32.totalorder %s29, 1
      %p192 = por %p190, %p191
      %p193 = scmp.ne.s32.totalorder %s184, %s185
      %p194 = scmp.eq.s32.totalorder %s29, 0
      %p195 = por %p193, %p194
      %p196 = scmp.ne.s32.totalorder %s184, %s185
      %p197 = scmp.eq.s32.totalorder %s30, 1
      %p198 = por %p196, %p197
      %p200 = scmp.ne.s32.totalorder %s185, %s199
      %p201 = scmp.eq.s32.totalorder %s30, 0
      %p202 = por %p200, %p201
      %s204 = sadd.s32 %s203, 1
      %p207 = scmp.eq.s32.totalorder %s24, 1
      %p208 = scmp.ne.s32.totalorder %s203, %s205
      %p209 = scmp.eq.s32.totalorder %s24, 0
      %p210 = por %p208, %p209
      %p211 = scmp.ne.s32.totalorder %s203, %s205
      %p212 = scmp.eq.s32.totalorder %s29, 1
      %p213 = por %p211, %p212
      %p214 = scmp.ne.s32.totalorder %s205, %s206
      %p215 = scmp.eq.s32.totalorder %s29, 0
      %p216 = por %p214, %p215
      %p217 = scmp.ne.s32.totalorder %s205, %s206
      %p218 = scmp.eq.s32.totalorder %s30, 1
      %p219 = por %p217, %p218
      %p221 = scmp.ne.s32.totalorder %s206, %s220
      %p222 = scmp.eq.s32.totalorder %s30, 0
      %p223 = por %p221, %p222
      %s224 = ssub.s32 %s31, %s43
      %s225 = ssub.s32 %s32, %s39
      %s226 = sor.u32 %s224, %s225
      %p227 = scmp.eq.s32.totalorder %s226, 0
      %s229 = sadd.s32 %s228, 1
      %s230 = scalar_select %p227, %s228, %s229
      %p233 = pneg %p227
      %p234 = scmp.eq.s32.totalorder %s24, 1
      %p235 = por %p233, %p234
      %p236 = scmp.ne.s32.totalorder %s228, %s231
      %p237 = scmp.eq.s32.totalorder %s24, 0
      %p238 = por %p236, %p237
      %p239 = scmp.ne.s32.totalorder %s228, %s231
      %p240 = scmp.eq.s32.totalorder %s29, 1
      %p241 = por %p239, %p240
      %p242 = scmp.ne.s32.totalorder %s231, %s232
      %p243 = scmp.eq.s32.totalorder %s29, 0
      %p244 = por %p242, %p243
      %p245 = scmp.ne.s32.totalorder %s231, %s232
      %p246 = scmp.eq.s32.totalorder %s30, 1
      %p247 = por %p245, %p246
      %p249 = scmp.ne.s32.totalorder %s232, %s248
      %p250 = scmp.eq.s32.totalorder %s30, 0
      %p251 = por %p249, %p250
      %p252 = scmp.le.s32.totalorder 1, %s24
      %p253 = scmp.lt.s32.totalorder %s24, 3
      %p254 = pnand %p252, %p253
      %p255 = pneg %p254
      // Predicated region
      $region9: #{tpu_custom_call.1} parent=5 // pred_check
        _
      $region10: #{tpu_custom_call.1} parent=5 // pred_check_branch
        %257 = sbr.rel (%p254) target = $region12
      $region11: #{tpu_custom_call.1} parent=5 // pred_region
        %s258 = ssub.s32 %s24, 1
        // Predicated region
        $region13: #{tpu_custom_call.1} parent=11 // pred_check
          %p259 = pneg %p111
        $region14: #{tpu_custom_call.1} parent=11 // pred_check_branch
          %261 = sbr.rel (%p259) target = $region16
        $region15: #{tpu_custom_call.1} parent=11 // pred_region
          %s263 = ssub.s32 768, 768
          %264 = vsyncadd [#allocation8], %s263
          %s265 = sshll.u32 [#allocation9], 4
          %s266 = int_to_ptr.vmem [resolvable:$true] %s265
          %271 = dma.hbm_to_vmem [thread:$0]  %s2, 768, %s266, [#allocation8], 64, 64, 4
        $region16: #{tpu_custom_call.1} parent=11 // pred_fallthru
          _
        // Predicated region
        $region17: #{tpu_custom_call.1} parent=11 // pred_check
          %p272 = pneg %p132
        $region18: #{tpu_custom_call.1} parent=11 // pred_check_branch
          %274 = sbr.rel (%p272) target = $region20
        $region19: #{tpu_custom_call.1} parent=11 // pred_region
          _
        $region20: #{tpu_custom_call.1} parent=11 // pred_fallthru
          _
        // Predicated region
        $region21: #{tpu_custom_call.1} parent=11 // pred_check
          %p275 = pneg %p153
        $region22: #{tpu_custom_call.1} parent=11 // pred_check_branch
          %277 = sbr.rel (%p275) target = $region24
        $region23: #{tpu_custom_call.1} parent=11 // pred_region
          %s279 = ssub.s32 256, 256
          %280 = vsyncadd [#allocation11], %s279
          %s281 = sshll.u32 [#allocation10], 4
          %s282 = int_to_ptr.vmem [resolvable:$true] %s281
          %287 = dma.hbm_to_vmem [thread:$0]  %s4, 256, %s282, [#allocation11], 64, 64, 4
        $region24: #{tpu_custom_call.1} parent=11 // pred_fallthru
          _
        // Predicated region
        $region25: #{tpu_custom_call.1} parent=11 // pred_check
          %p288 = pneg %p174
        $region26: #{tpu_custom_call.1} parent=11 // pred_check_branch
          %290 = sbr.rel (%p288) target = $region28
        $region27: #{tpu_custom_call.1} parent=11 // pred_region
          _
        $region28: #{tpu_custom_call.1} parent=11 // pred_fallthru
          _
        // Predicated region
        $region29: #{tpu_custom_call.1} parent=11 // pred_check
          %p291 = pneg %p195
        $region30: #{tpu_custom_call.1} parent=11 // pred_check_branch
          %293 = sbr.rel (%p291) target = $region32
        $region31: #{tpu_custom_call.1} parent=11 // pred_region
          _
        $region32: #{tpu_custom_call.1} parent=11 // pred_fallthru
          _
        // Predicated region
        $region33: #{tpu_custom_call.1} parent=11 // pred_check
          %p294 = pneg %p216
        $region34: #{tpu_custom_call.1} parent=11 // pred_check_branch
          %296 = sbr.rel (%p294) target = $region36
        $region35: #{tpu_custom_call.1} parent=11 // pred_region
          _
        $region36: #{tpu_custom_call.1} parent=11 // pred_fallthru
          _
      $region12: #{tpu_custom_call.1} parent=5 // pred_fallthru
        _
      %p297 = scmp.lt.s32.totalorder %s24, 2
      // Predicated region
      $region37: #{tpu_custom_call.1} parent=5 // pred_check
        %p298 = pneg %p297
      $region38: #{tpu_custom_call.1} parent=5 // pred_check_branch
        %300 = sbr.rel (%p298) target = $region40
      $region39: #{tpu_custom_call.1} parent=5 // pred_region
        // Predicated region
        $region41: #{tpu_custom_call.1} parent=39 // pred_check
          %p301 = pneg %p58
        $region42: #{tpu_custom_call.1} parent=39 // pred_check_branch
          %303 = sbr.rel (%p301) target = $region44
        $region43: #{tpu_custom_call.1} parent=39 // pred_region
          %s304 = sand.u32 %s48, 1
          %s305 = scalar_lea.sflag [#allocation5], %s304
          %s306 = sand.u32 %s48, 1
          %s307 = smul.addr %s306, 8
          %s308 = scalar_lea.vmem [#allocation4], %s307
          %s310 = ssub.s32 128, 128
          %311 = vsyncadd %s305, %s310
          %s312 = sadd.s32 %s32, %s31
          %s313 = smul.addr %s312, 128
          %s314 = scalar_lea.hbm %s0, %s313
          %s316 = sshll.u32 %s308, 4
          %s317 = int_to_ptr.vmem [resolvable:$true] %s316
          %319 = dma.hbm_to_vmem [thread:$0]  %s314, 128, %s317, %s305
        $region44: #{tpu_custom_call.1} parent=39 // pred_fallthru
          _
        // Predicated region
        $region45: #{tpu_custom_call.1} parent=39 // pred_check
          %p320 = pneg %p84
        $region46: #{tpu_custom_call.1} parent=39 // pred_check_branch
          %322 = sbr.rel (%p320) target = $region48
        $region47: #{tpu_custom_call.1} parent=39 // pred_region
          %s323 = sand.u32 %s24, 1
          %s324 = scalar_lea.sflag [#allocation8], %s323
          %s325 = sand.u32 %s74, 1
          %s326 = smul.addr %s325, 8
          %s327 = scalar_lea.vmem [#allocation7], %s326
          %s329 = ssub.s32 128, 128
          %330 = vsyncadd %s324, %s329
          %s331 = smul.addr %s31, 128
          %s332 = scalar_lea.hbm %s1, %s331
          %s334 = sshll.u32 %s327, 4
          %s335 = int_to_ptr.vmem [resolvable:$true] %s334
          %337 = dma.hbm_to_vmem [thread:$0]  %s332, 128, %s335, %s324
        $region48: #{tpu_custom_call.1} parent=39 // pred_fallthru
          _
      $region40: #{tpu_custom_call.1} parent=5 // pred_fallthru
        _
      %p338 = scmp.le.s32.totalorder 1, %s24
      %p339 = scmp.lt.s32.totalorder %s24, 3
      %p340 = pnand %p338, %p339
      %p341 = pneg %p340
      // Predicated region
      $region49: #{tpu_custom_call.1} parent=5 // pred_check
        _
      $region50: #{tpu_custom_call.1} parent=5 // pred_check_branch
        %343 = sbr.rel (%p340) target = $region52
      $region51: #{tpu_custom_call.1} parent=5 // pred_region
        %s344 = ssub.s32 %s24, 1
        %s345 = sand.u32 %s51, 1
        %s346 = scalar_lea.sflag [#allocation5], %s345
        %s347 = sand.u32 %s51, 1
        %s348 = smul.addr %s347, 8
        %s349 = scalar_lea.vmem [#allocation4], %s348
        // Predicated region
        $region53: #{tpu_custom_call.1} parent=51 // pred_check
          %p350 = pneg %p64
        $region54: #{tpu_custom_call.1} parent=51 // pred_check_branch
          %352 = sbr.rel (%p350) target = $region56
        $region55: #{tpu_custom_call.1} parent=51 // pred_region
          %353 = dma.done %s346, 128
        $region56: #{tpu_custom_call.1} parent=51 // pred_fallthru
          _
        %s354 = sand.u32 %s29, 1
        %s355 = scalar_lea.sflag [#allocation8], %s354
        %s356 = sand.u32 %s77, 1
        %s357 = smul.addr %s356, 8
        %s358 = scalar_lea.vmem [#allocation7], %s357
        // Predicated region
        $region57: #{tpu_custom_call.1} parent=51 // pred_check
          %p359 = pneg %p90
        $region58: #{tpu_custom_call.1} parent=51 // pred_check_branch
          %361 = sbr.rel (%p359) target = $region60
        $region59: #{tpu_custom_call.1} parent=51 // pred_region
          %362 = dma.done %s355, 128
        $region60: #{tpu_custom_call.1} parent=51 // pred_fallthru
          _
        // Predicated region
        $region61: #{tpu_custom_call.1} parent=51 // pred_check
          %p363 = pneg %p111
        $region62: #{tpu_custom_call.1} parent=51 // pred_check_branch
          %365 = sbr.rel (%p363) target = $region64
        $region63: #{tpu_custom_call.1} parent=51 // pred_region
          %366 = dma.done [#allocation8], 768
        $region64: #{tpu_custom_call.1} parent=51 // pred_fallthru
          _
        // Predicated region
        $region65: #{tpu_custom_call.1} parent=51 // pred_check
          %p367 = pneg %p153
        $region66: #{tpu_custom_call.1} parent=51 // pred_check_branch
          %369 = sbr.rel (%p367) target = $region68
        $region67: #{tpu_custom_call.1} parent=51 // pred_region
          %370 = dma.done [#allocation11], 256
        $region68: #{tpu_custom_call.1} parent=51 // pred_fallthru
          _
        %s371 = sand.u32 %s51, 1
        %s372 = scalar_lea.sflag [#allocation5], %s371
        %s373 = sand.u32 %s51, 1
        %s374 = smul.addr %s373, 8
        %s375 = scalar_lea.vmem [#allocation4], %s374
        %p376 = pneg %p64
        %p377 = pneg %p61
        %s378 = sand.u32 %s29, 1
        %s379 = scalar_lea.sflag [#allocation8], %s378
        %s380 = sand.u32 %s77, 1
        %s381 = smul.addr %s380, 8
        %s382 = scalar_lea.vmem [#allocation7], %s381
        %p383 = pneg %p90
        %p384 = pneg %p87
        %p385 = pneg %p111
        %p386 = pneg %p108
        %p387 = pneg %p132
        %p388 = pneg %p129
        %p389 = pneg %p153
        %p390 = pneg %p150
        %p391 = pneg %p174
        %p392 = pneg %p171
        %p393 = pneg %p195
        %p394 = pneg %p192
        %p395 = pneg %p216
        %p396 = pneg %p213
        %p397 = pneg %p244
        %p398 = pneg %p241
        %s399 = sand.u32 %s231, 1
        %s400 = scalar_lea.sflag [#allocation6], %s399
        %s401 = sand.u32 %s231, 1
        %s402 = smul.addr %s401, 8
        %s403 = scalar_lea.vmem [#allocation12], %s402
        %p405 = scmp.eq.s32.totalorder %s34, 0
        // Predicated region
        $region69: #{tpu_custom_call.1} parent=51 // pred_check
          %p406 = pneg %p405
        $region70: #{tpu_custom_call.1} parent=51 // pred_check_branch
          %408 = sbr.rel (%p406) target = $region72
        $region71: #{tpu_custom_call.1} parent=51 // pred_region
          %v409 = vld [vmem:[%s358] sm:$0xff]
          %v410 = vld [vmem:[%s6] sm:$0x1]
          %v411 = vld [vmem:[%s7] sm:$0x1]
          %vm412 = vcmask 261120
          %v413 = vsel %vm412, %v409, 0.0
          %414 = vadd.xlane.f32.xlu0 %v413
          %v415 = vpop.xlane.xlu0 %414
          %v416 = vrcp.pop 32.0
          %v417 = vmul.f32 %v415, %v416
          %v418 = vsub.f32 %v409, %v417
          %v419 = vmul.f32 %v418, %v418
          %v420 = vsel %vm412, %v419, 0.0
          %421 = vadd.xlane.f32.xlu0 %v420
          %v422 = vpop.xlane.xlu0 %421
          %v423 = vmul.f32 %v422, %v416
          %v424 = vadd.f32 %v423, 1e-05
          %v425 = vrsqrt.pop %v424
          %v426 = vmul.f32 %v418, %v425
          %v428 = vlaneseq
          %v429 = vshrl.u32 %v428, 7
          %v430 = vsub.s32 0, %v429
          %v431 = vrot.slane %v410, %v430
          %v433 = vmul.f32 %v426, %v431
          %v435 = vlaneseq
          %v436 = vshrl.u32 %v435, 7
          %v437 = vsub.s32 0, %v436
          %v438 = vrot.slane %v411, %v437
          %v440 = vadd.f32 %v433, %v438
          %v441 = vpack.c.bf16 %v440, %v440
          %s442 = scalar_lea.vmem [#allocation9], 16
          %v443 = vld [vmem:[%s442] sm:$0xf]
          %v444 = vld [vmem:[%s442 + $0x4] sm:$0xf]
          %v445 = vld [vmem:[%s442 + $0x8] sm:$0xf]
          %v446 = vld [vmem:[%s442 + $0xc] sm:$0xf]
          %s447 = scalar_lea.vmem %s3, 1
          %v448 = vld [vmem:[%s447] sm:$0x1]
          %v450 = vlaneseq
          %v451 = vshrl.u32 %v450, 7
          %v452 = vsub.s32 0, %v451
          %v453 = vrot.slane %v448, %v452
          %v459 = vunpack.c.l.b16 %v443
          %v460 = vunpack.c.l.b16 %v444
          %v461 = vunpack.c.l.b16 %v445
          %v462 = vunpack.c.l.b16 %v446
          %v463 = vpack.c.b16 %v460, %v459
          %v464 = vpack.c.b16 %v462, %v461
          %v468 = vsel %vm412, %v441, 0
          %470 = vmatprep.subr.bf16.mxu0 0
          %471 = vmatpush1.bf16.msra.mxu0 %v463
          %472 = vmatprep.subr.bf16.mxu0 0
          %473 = vmatpush1.bf16.msra.mxu0 %v464
          %474 = vmatprep.subr.bf16.mxu0 0
          %475 = vmatpush1.bf16.msra.mxu0 0
          %476 = vmatprep.subr.bf16.mxu0 0
          %477 = vmatpush1.bf16.msra.mxu0 0
          %478 = vmatprep.subr.bf16.mxu0 0
          %479 = vmatpush1.bf16.msra.mxu0 0
          %480 = vmatprep.subr.bf16.mxu0 0
          %481 = vmatpush1.bf16.msra.mxu0 0
          %482 = vmatprep.subr.bf16.mxu0 0
          %483 = vmatpush1.bf16.msra.mxu0 0
          %484 = vmatprep.subr.bf16.mxu0 0
          %485 = vmatpush1.bf16.msra.mxu0 0
          %486 = vmatprep.subr.bf16.mxu0 0
          %487 = vmatpush1.bf16.msra.mxu0 0
          %488 = vmatprep.subr.bf16.mxu0 0
          %489 = vmatpush1.bf16.msra.mxu0 0
          %490 = vmatprep.subr.bf16.mxu0 0
          %491 = vmatpush1.bf16.msra.mxu0 0
          %492 = vmatprep.subr.bf16.mxu0 0
          %493 = vmatpush1.bf16.msra.mxu0 0
          %494 = vmatprep.subr.bf16.mxu0 0
          %495 = vmatpush1.bf16.msra.mxu0 0
          %496 = vmatprep.subr.bf16.mxu0 0
          %497 = vmatpush1.bf16.msra.mxu0 0
          %498 = vmatprep.subr.bf16.mxu0 0
          %499 = vmatpush1.bf16.msra.mxu0 0
          %500 = vmatprep.subr.bf16.mxu0 0
          %501 = vmatpush1.bf16.msra.mxu0 0
          %502 = vmatprep.mubr.bf16.mxu0 0
          %503 = vmatmul.mubr.bf16.gmra.mrb[0].mxu0 %v468
          %v504 = vpop.f32.mrb[0].mxu0
          %v505 = vadd.f32 %v453, %v504
          %v506 = vpop.f32.mrb[0].mxu0
          %v507 = vpop.f32.mrb[0].mxu0
          %v508 = vpop.f32.mrb[0].mxu0
          %509 = vdwg.mxu0
          %s510 = scalar_lea.vmem [#allocation9], 32
          %v511 = vld [vmem:[%s510] sm:$0xf]
          %v512 = vld [vmem:[%s510 + $0x4] sm:$0xf]
          %v513 = vld [vmem:[%s510 + $0x8] sm:$0xf]
          %v514 = vld [vmem:[%s510 + $0xc] sm:$0xf]
          %s515 = scalar_lea.vmem %s3, 2
          %v516 = vld [vmem:[%s515] sm:$0x1]
          %v518 = vlaneseq
          %v519 = vshrl.u32 %v518, 7
          %v520 = vsub.s32 0, %v519
          %v521 = vrot.slane %v516, %v520
          %v527 = vunpack.c.l.b16 %v511
          %v528 = vunpack.c.l.b16 %v512
          %v529 = vunpack.c.l.b16 %v513
          %v530 = vunpack.c.l.b16 %v514
          %v531 = vpack.c.b16 %v528, %v527
          %v532 = vpack.c.b16 %v530, %v529
          %535 = vmatprep.subr.bf16.mxu0 0
          %536 = vmatpush1.bf16.msra.mxu0 %v531
          %537 = vmatprep.subr.bf16.mxu0 0
          %538 = vmatpush1.bf16.msra.mxu0 %v532
          %539 = vmatprep.subr.bf16.mxu0 0
          %540 = vmatpush1.bf16.msra.mxu0 0
          %541 = vmatprep.subr.bf16.mxu0 0
          %542 = vmatpush1.bf16.msra.mxu0 0
          %543 = vmatprep.subr.bf16.mxu0 0
          %544 = vmatpush1.bf16.msra.mxu0 0
          %545 = vmatprep.subr.bf16.mxu0 0
          %546 = vmatpush1.bf16.msra.mxu0 0
          %547 = vmatprep.subr.bf16.mxu0 0
          %548 = vmatpush1.bf16.msra.mxu0 0
          %549 = vmatprep.subr.bf16.mxu0 0
          %550 = vmatpush1.bf16.msra.mxu0 0
          %551 = vmatprep.subr.bf16.mxu0 0
          %552 = vmatpush1.bf16.msra.mxu0 0
          %553 = vmatprep.subr.bf16.mxu0 0
          %554 = vmatpush1.bf16.msra.mxu0 0
          %555 = vmatprep.subr.bf16.mxu0 0
          %556 = vmatpush1.bf16.msra.mxu0 0
          %557 = vmatprep.subr.bf16.mxu0 0
          %558 = vmatpush1.bf16.msra.mxu0 0
          %559 = vmatprep.subr.bf16.mxu0 0
          %560 = vmatpush1.bf16.msra.mxu0 0
          %561 = vmatprep.subr.bf16.mxu0 0
          %562 = vmatpush1.bf16.msra.mxu0 0
          %563 = vmatprep.subr.bf16.mxu0 0
          %564 = vmatpush1.bf16.msra.mxu0 0
          %565 = vmatprep.subr.bf16.mxu0 0
          %566 = vmatpush1.bf16.msra.mxu0 0
          %567 = vmatprep.mubr.bf16.mxu0 0
          %568 = vmatmul.mubr.bf16.gmra.mrb[0].mxu0 %v468
          %v569 = vpop.f32.mrb[0].mxu0
          %v570 = vadd.f32 %v521, %v569
          %v571 = vpop.f32.mrb[0].mxu0
          %v572 = vpop.f32.mrb[0].mxu0
          %v573 = vpop.f32.mrb[0].mxu0
          %574 = vdwg.mxu0
          %576 = vrot.lane.b32.xlu0 %v505, 120
          %v577 = vpop.permute.xlu0 %576
          %579 = vrot.lane.b32.xlu0 %v505, 112
          %v580 = vpop.permute.xlu0 %579
          %582 = vrot.lane.b32.xlu0 %v505, 104
          %v583 = vpop.permute.xlu0 %582
          %v585 = vcombine.low %v505, %v580
          %v586 = vcombine.high %v505, %v580
          %v588 = vunpack.c.l.s4 1983009808
          %v589 = vunpack.c.0.s8 %v588
          %v590 = vlaneseq
          %v591 = vshrl.u32 %v590, 7
          %v592 = vsub.s32 %v589, %v591
          %v593 = vrot.slane %v585, %v592
          %v595 = vunpack.c.l.s4 1983009808
          %v596 = vunpack.c.0.s8 %v595
          %v597 = vlaneseq
          %v598 = vshrl.u32 %v597, 7
          %v599 = vsub.s32 %v596, %v598
          %v600 = vrot.slane %v586, %v599
          %v601 = vcombine.low %v577, %v583
          %v602 = vcombine.high %v577, %v583
          %v604 = vunpack.c.l.s4 1983009808
          %v605 = vunpack.c.0.s8 %v604
          %v606 = vlaneseq
          %v607 = vshrl.u32 %v606, 7
          %v608 = vsub.s32 %v605, %v607
          %v609 = vrot.slane %v601, %v608
          %v611 = vunpack.c.l.s4 1983009808
          %v612 = vunpack.c.0.s8 %v611
          %v613 = vlaneseq
          %v614 = vshrl.u32 %v613, 7
          %v615 = vsub.s32 %v612, %v614
          %v616 = vrot.slane %v602, %v615
          %v617 = vcombine.low %v593, %v609
          %v618 = vcombine.high %v593, %v609
          %v620 = vunpack.c.l.s4 1934713408
          %v621 = vunpack.c.0.s8 %v620
          %v622 = vlaneseq
          %v623 = vshrl.u32 %v622, 7
          %v624 = vsub.s32 %v621, %v623
          %v625 = vrot.slane %v617, %v624
          %v627 = vunpack.c.l.s4 1934713408
          %v628 = vunpack.c.0.s8 %v627
          %v629 = vlaneseq
          %v630 = vshrl.u32 %v629, 7
          %v631 = vsub.s32 %v628, %v630
          %v632 = vrot.slane %v618, %v631
          %v633 = vcombine.low %v600, %v616
          %v634 = vcombine.high %v600, %v616
          %v636 = vunpack.c.l.s4 1934713408
          %v637 = vunpack.c.0.s8 %v636
          %v638 = vlaneseq
          %v639 = vshrl.u32 %v638, 7
          %v640 = vsub.s32 %v637, %v639
          %v641 = vrot.slane %v633, %v640
          %v643 = vunpack.c.l.s4 1934713408
          %v644 = vunpack.c.0.s8 %v643
          %v645 = vlaneseq
          %v646 = vshrl.u32 %v645, 7
          %v647 = vsub.s32 %v644, %v646
          %v648 = vrot.slane %v634, %v647
          %v649 = vcombine.high %v625, 0.0
          %v650 = vcombine.high %v632, 0.0
          %v651 = vcombine.high %v641, 0.0
          %v652 = vcombine.high %v648, 0.0
          %v653 = vcombine.low %v625, %v632
          %v655 = vunpack.c.l.s4 1983009808
          %v656 = vunpack.c.0.s8 %v655
          %v657 = vlaneseq
          %v658 = vshrl.u32 %v657, 7
          %v659 = vsub.s32 %v656, %v658
          %v660 = vrot.slane %v653, %v659
          %v661 = vcombine.low %v649, %v650
          %v663 = vunpack.c.l.s4 1983009808
          %v664 = vunpack.c.0.s8 %v663
          %v665 = vlaneseq
          %v666 = vshrl.u32 %v665, 7
          %v667 = vsub.s32 %v664, %v666
          %v668 = vrot.slane %v661, %v667
          %v669 = vcombine.low %v641, %v648
          %v671 = vunpack.c.l.s4 1983009808
          %v672 = vunpack.c.0.s8 %v671
          %v673 = vlaneseq
          %v674 = vshrl.u32 %v673, 7
          %v675 = vsub.s32 %v672, %v674
          %v676 = vrot.slane %v669, %v675
          %v677 = vcombine.low %v651, %v652
          %v679 = vunpack.c.l.s4 1983009808
          %v680 = vunpack.c.0.s8 %v679
          %v681 = vlaneseq
          %v682 = vshrl.u32 %v681, 7
          %v683 = vsub.s32 %v680, %v682
          %v684 = vrot.slane %v677, %v683
          %v685 = vcombine.low %v660, %v668
          %v686 = vcombine.high %v660, %v668
          %v688 = vunpack.c.l.s4 1934713408
          %v689 = vunpack.c.0.s8 %v688
          %v690 = vlaneseq
          %v691 = vshrl.u32 %v690, 7
          %v692 = vsub.s32 %v689, %v691
          %v693 = vrot.slane %v685, %v692
          %v695 = vunpack.c.l.s4 1934713408
          %v696 = vunpack.c.0.s8 %v695
          %v697 = vlaneseq
          %v698 = vshrl.u32 %v697, 7
          %v699 = vsub.s32 %v696, %v698
          %v700 = vrot.slane %v686, %v699
          %v701 = vcombine.low %v676, %v684
          %v702 = vcombine.high %v676, %v684
          %v704 = vunpack.c.l.s4 1934713408
          %v705 = vunpack.c.0.s8 %v704
          %v706 = vlaneseq
          %v707 = vshrl.u32 %v706, 7
          %v708 = vsub.s32 %v705, %v707
          %v709 = vrot.slane %v701, %v708
          %v711 = vunpack.c.l.s4 1934713408
          %v712 = vunpack.c.0.s8 %v711
          %v713 = vlaneseq
          %v714 = vshrl.u32 %v713, 7
          %v715 = vsub.s32 %v712, %v714
          %v716 = vrot.slane %v702, %v715
          %v717 = vcombine.low %v693, %v709
          %v718 = vcombine.high %v693, %v709
          %v719 = vcombine.low %v700, %v716
          %v720 = vcombine.high %v700, %v716
          %v721 = vpack.c.bf16 %v717, %v717
          %v722 = vpack.c.bf16 %v718, %v718
          %v723 = vpack.c.bf16 %v719, %v719
          %v724 = vpack.c.bf16 %v720, %v720
          %vm725 = vcmask 60416
          %726 = vst.msk [vmem:[#allocation2] sm:$0xf] %vm725, %v721
          %727 = vst.msk [vmem:[#allocation2 + $0x4] sm:$0xf] %vm725, %v722
          %728 = vst.msk [vmem:[#allocation2 + $0x8] sm:$0xf] %vm725, %v723
          %729 = vst.msk [vmem:[#allocation2 + $0xc] sm:$0xf] %vm725, %v724
          %731 = vrot.lane.b32.xlu0 %v570, 120
          %v732 = vpop.permute.xlu0 %731
          %734 = vrot.lane.b32.xlu0 %v570, 112
          %v735 = vpop.permute.xlu0 %734
          %737 = vrot.lane.b32.xlu0 %v570, 104
          %v738 = vpop.permute.xlu0 %737
          %v740 = vcombine.low %v570, %v735
          %v741 = vcombine.high %v570, %v735
          %v743 = vunpack.c.l.s4 1983009808
          %v744 = vunpack.c.0.s8 %v743
          %v745 = vlaneseq
          %v746 = vshrl.u32 %v745, 7
          %v747 = vsub.s32 %v744, %v746
          %v748 = vrot.slane %v740, %v747
          %v750 = vunpack.c.l.s4 1983009808
          %v751 = vunpack.c.0.s8 %v750
          %v752 = vlaneseq
          %v753 = vshrl.u32 %v752, 7
          %v754 = vsub.s32 %v751, %v753
          %v755 = vrot.slane %v741, %v754
          %v756 = vcombine.low %v732, %v738
          %v757 = vcombine.high %v732, %v738
          %v759 = vunpack.c.l.s4 1983009808
          %v760 = vunpack.c.0.s8 %v759
          %v761 = vlaneseq
          %v762 = vshrl.u32 %v761, 7
          %v763 = vsub.s32 %v760, %v762
          %v764 = vrot.slane %v756, %v763
          %v766 = vunpack.c.l.s4 1983009808
          %v767 = vunpack.c.0.s8 %v766
          %v768 = vlaneseq
          %v769 = vshrl.u32 %v768, 7
          %v770 = vsub.s32 %v767, %v769
          %v771 = vrot.slane %v757, %v770
          %v772 = vcombine.low %v748, %v764
          %v773 = vcombine.high %v748, %v764
          %v775 = vunpack.c.l.s4 1934713408
          %v776 = vunpack.c.0.s8 %v775
          %v777 = vlaneseq
          %v778 = vshrl.u32 %v777, 7
          %v779 = vsub.s32 %v776, %v778
          %v780 = vrot.slane %v772, %v779
          %v782 = vunpack.c.l.s4 1934713408
          %v783 = vunpack.c.0.s8 %v782
          %v784 = vlaneseq
          %v785 = vshrl.u32 %v784, 7
          %v786 = vsub.s32 %v783, %v785
          %v787 = vrot.slane %v773, %v786
          %v788 = vcombine.low %v755, %v771
          %v789 = vcombine.high %v755, %v771
          %v791 = vunpack.c.l.s4 1934713408
          %v792 = vunpack.c.0.s8 %v791
          %v793 = vlaneseq
          %v794 = vshrl.u32 %v793, 7
          %v795 = vsub.s32 %v792, %v794
          %v796 = vrot.slane %v788, %v795
          %v798 = vunpack.c.l.s4 1934713408
          %v799 = vunpack.c.0.s8 %v798
          %v800 = vlaneseq
          %v801 = vshrl.u32 %v800, 7
          %v802 = vsub.s32 %v799, %v801
          %v803 = vrot.slane %v789, %v802
          %v804 = vcombine.high %v780, 0.0
          %v805 = vcombine.high %v787, 0.0
          %v806 = vcombine.high %v796, 0.0
          %v807 = vcombine.high %v803, 0.0
          %v808 = vcombine.low %v780, %v787
          %v810 = vunpack.c.l.s4 1983009808
          %v811 = vunpack.c.0.s8 %v810
          %v812 = vlaneseq
          %v813 = vshrl.u32 %v812, 7
          %v814 = vsub.s32 %v811, %v813
          %v815 = vrot.slane %v808, %v814
          %v816 = vcombine.low %v804, %v805
          %v818 = vunpack.c.l.s4 1983009808
          %v819 = vunpack.c.0.s8 %v818
          %v820 = vlaneseq
          %v821 = vshrl.u32 %v820, 7
          %v822 = vsub.s32 %v819, %v821
          %v823 = vrot.slane %v816, %v822
          %v824 = vcombine.low %v796, %v803
          %v826 = vunpack.c.l.s4 1983009808
          %v827 = vunpack.c.0.s8 %v826
          %v828 = vlaneseq
          %v829 = vshrl.u32 %v828, 7
          %v830 = vsub.s32 %v827, %v829
          %v831 = vrot.slane %v824, %v830
          %v832 = vcombine.low %v806, %v807
          %v834 = vunpack.c.l.s4 1983009808
          %v835 = vunpack.c.0.s8 %v834
          %v836 = vlaneseq
          %v837 = vshrl.u32 %v836, 7
          %v838 = vsub.s32 %v835, %v837
          %v839 = vrot.slane %v832, %v838
          %v840 = vcombine.low %v815, %v823
          %v841 = vcombine.high %v815, %v823
          %v843 = vunpack.c.l.s4 1934713408
          %v844 = vunpack.c.0.s8 %v843
          %v845 = vlaneseq
          %v846 = vshrl.u32 %v845, 7
          %v847 = vsub.s32 %v844, %v846
          %v848 = vrot.slane %v840, %v847
          %v850 = vunpack.c.l.s4 1934713408
          %v851 = vunpack.c.0.s8 %v850
          %v852 = vlaneseq
          %v853 = vshrl.u32 %v852, 7
          %v854 = vsub.s32 %v851, %v853
          %v855 = vrot.slane %v841, %v854
          %v856 = vcombine.low %v831, %v839
          %v857 = vcombine.high %v831, %v839
          %v859 = vunpack.c.l.s4 1934713408
          %v860 = vunpack.c.0.s8 %v859
          %v861 = vlaneseq
          %v862 = vshrl.u32 %v861, 7
          %v863 = vsub.s32 %v860, %v862
          %v864 = vrot.slane %v856, %v863
          %v866 = vunpack.c.l.s4 1934713408
          %v867 = vunpack.c.0.s8 %v866
          %v868 = vlaneseq
          %v869 = vshrl.u32 %v868, 7
          %v870 = vsub.s32 %v867, %v869
          %v871 = vrot.slane %v857, %v870
          %v872 = vcombine.low %v848, %v864
          %v873 = vcombine.high %v848, %v864
          %v874 = vcombine.low %v855, %v871
          %v875 = vcombine.high %v855, %v871
          %v876 = vpack.c.bf16 %v872, %v872
          %v877 = vpack.c.bf16 %v873, %v873
          %v878 = vpack.c.bf16 %v874, %v874
          %v879 = vpack.c.bf16 %v875, %v875
          %880 = vst.msk [vmem:[#allocation3] sm:$0xf] %vm725, %v876
          %881 = vst.msk [vmem:[#allocation3 + $0x4] sm:$0xf] %vm725, %v877
          %882 = vst.msk [vmem:[#allocation3 + $0x8] sm:$0xf] %vm725, %v878
          %883 = vst.msk [vmem:[#allocation3 + $0xc] sm:$0xf] %vm725, %v879
        $region72: #{tpu_custom_call.1} parent=51 // pred_fallthru
          _
        %v884 = vld [vmem:[%s349] sm:$0xff]
        %v885 = vld [vmem:[%s6] sm:$0x1]
        %v886 = vld [vmem:[%s7] sm:$0x1]
        %vm887 = vcmask 261120
        %v888 = vsel %vm887, %v884, 0.0
        %889 = vadd.xlane.f32.xlu0 %v888
        %v890 = vpop.xlane.xlu0 %889
        %v891 = vrcp.pop 32.0
        %v892 = vmul.f32 %v890, %v891
        %v893 = vsub.f32 %v884, %v892
        %v894 = vmul.f32 %v893, %v893
        %v895 = vsel %vm887, %v894, 0.0
        %896 = vadd.xlane.f32.xlu0 %v895
        %v897 = vpop.xlane.xlu0 %896
        %v898 = vmul.f32 %v897, %v891
        %v899 = vadd.f32 %v898, 1e-05
        %v900 = vrsqrt.pop %v899
        %v901 = vmul.f32 %v893, %v900
        %v903 = vlaneseq
        %v904 = vshrl.u32 %v903, 7
        %v905 = vsub.s32 0, %v904
        %v906 = vrot.slane %v885, %v905
        %v908 = vmul.f32 %v901, %v906
        %v910 = vlaneseq
        %v911 = vshrl.u32 %v910, 7
        %v912 = vsub.s32 0, %v911
        %v913 = vrot.slane %v886, %v912
        %v915 = vadd.f32 %v908, %v913
        %v916 = vpack.c.bf16 %v915, %v915
        %v917 = vld [vmem:[#allocation9] sm:$0xf]
        %v918 = vld [vmem:[#allocation9 + $0x4] sm:$0xf]
        %v919 = vld [vmem:[#allocation9 + $0x8] sm:$0xf]
        %v920 = vld [vmem:[#allocation9 + $0xc] sm:$0xf]
        %v921 = vld [vmem:[%s3] sm:$0x1]
        %v923 = vlaneseq
        %v924 = vshrl.u32 %v923, 7
        %v925 = vsub.s32 0, %v924
        %v926 = vrot.slane %v921, %v925
        %v932 = vunpack.c.l.b16 %v917
        %v933 = vunpack.c.l.b16 %v918
        %v934 = vunpack.c.l.b16 %v919
        %v935 = vunpack.c.l.b16 %v920
        %v936 = vpack.c.b16 %v933, %v932
        %v937 = vpack.c.b16 %v935, %v934
        %v941 = vsel %vm887, %v916, 0
        %943 = vmatprep.subr.bf16.mxu0 0
        %944 = vmatpush1.bf16.msra.mxu0 %v936
        %945 = vmatprep.subr.bf16.mxu0 0
        %946 = vmatpush1.bf16.msra.mxu0 %v937
        %947 = vmatprep.subr.bf16.mxu0 0
        %948 = vmatpush1.bf16.msra.mxu0 0
        %949 = vmatprep.subr.bf16.mxu0 0
        %950 = vmatpush1.bf16.msra.mxu0 0
        %951 = vmatprep.subr.bf16.mxu0 0
        %952 = vmatpush1.bf16.msra.mxu0 0
        %953 = vmatprep.subr.bf16.mxu0 0
        %954 = vmatpush1.bf16.msra.mxu0 0
        %955 = vmatprep.subr.bf16.mxu0 0
        %956 = vmatpush1.bf16.msra.mxu0 0
        %957 = vmatprep.subr.bf16.mxu0 0
        %958 = vmatpush1.bf16.msra.mxu0 0
        %959 = vmatprep.subr.bf16.mxu0 0
        %960 = vmatpush1.bf16.msra.mxu0 0
        %961 = vmatprep.subr.bf16.mxu0 0
        %962 = vmatpush1.bf16.msra.mxu0 0
        %963 = vmatprep.subr.bf16.mxu0 0
        %964 = vmatpush1.bf16.msra.mxu0 0
        %965 = vmatprep.subr.bf16.mxu0 0
        %966 = vmatpush1.bf16.msra.mxu0 0
        %967 = vmatprep.subr.bf16.mxu0 0
        %968 = vmatpush1.bf16.msra.mxu0 0
        %969 = vmatprep.subr.bf16.mxu0 0
        %970 = vmatpush1.bf16.msra.mxu0 0
        %971 = vmatprep.subr.bf16.mxu0 0
        %972 = vmatpush1.bf16.msra.mxu0 0
        %973 = vmatprep.subr.bf16.mxu0 0
        %974 = vmatpush1.bf16.msra.mxu0 0
        %975 = vmatprep.mubr.bf16.mxu0 0
        %976 = vmatmul.mubr.bf16.gmra.mrb[0].mxu0 %v941
        %v977 = vpop.f32.mrb[0].mxu0
        %v978 = vadd.f32 %v926, %v977
        %v979 = vpop.f32.mrb[0].mxu0
        %v980 = vpop.f32.mrb[0].mxu0
        %v981 = vpop.f32.mrb[0].mxu0
        %982 = vdwg.mxu0
        %v983 = vmul.f32 %v978, 0.35355338
        %985 = vrot.lane.b32.xlu0 %v983, 120
        %v986 = vpop.permute.xlu0 %985
        %988 = vrot.lane.b32.xlu0 %v983, 112
        %v989 = vpop.permute.xlu0 %988
        %991 = vrot.lane.b32.xlu0 %v983, 104
        %v992 = vpop.permute.xlu0 %991
        %v994 = vcombine.low %v983, %v989
        %v995 = vcombine.high %v983, %v989
        %v997 = vunpack.c.l.s4 1983009808
        %v998 = vunpack.c.0.s8 %v997
        %v999 = vlaneseq
        %v1000 = vshrl.u32 %v999, 7
        %v1001 = vsub.s32 %v998, %v1000
        %v1002 = vrot.slane %v994, %v1001
        %v1004 = vunpack.c.l.s4 1983009808
        %v1005 = vunpack.c.0.s8 %v1004
        %v1006 = vlaneseq
        %v1007 = vshrl.u32 %v1006, 7
        %v1008 = vsub.s32 %v1005, %v1007
        %v1009 = vrot.slane %v995, %v1008
        %v1010 = vcombine.low %v986, %v992
        %v1011 = vcombine.high %v986, %v992
        %v1013 = vunpack.c.l.s4 1983009808
        %v1014 = vunpack.c.0.s8 %v1013
        %v1015 = vlaneseq
        %v1016 = vshrl.u32 %v1015, 7
        %v1017 = vsub.s32 %v1014, %v1016
        %v1018 = vrot.slane %v1010, %v1017
        %v1020 = vunpack.c.l.s4 1983009808
        %v1021 = vunpack.c.0.s8 %v1020
        %v1022 = vlaneseq
        %v1023 = vshrl.u32 %v1022, 7
        %v1024 = vsub.s32 %v1021, %v1023
        %v1025 = vrot.slane %v1011, %v1024
        %v1026 = vcombine.low %v1002, %v1018
        %v1027 = vcombine.high %v1002, %v1018
        %v1029 = vunpack.c.l.s4 1934713408
        %v1030 = vunpack.c.0.s8 %v1029
        %v1031 = vlaneseq
        %v1032 = vshrl.u32 %v1031, 7
        %v1033 = vsub.s32 %v1030, %v1032
        %v1034 = vrot.slane %v1026, %v1033
        %v1036 = vunpack.c.l.s4 1934713408
        %v1037 = vunpack.c.0.s8 %v1036
        %v1038 = vlaneseq
        %v1039 = vshrl.u32 %v1038, 7
        %v1040 = vsub.s32 %v1037, %v1039
        %v1041 = vrot.slane %v1027, %v1040
        %v1042 = vcombine.low %v1009, %v1025
        %v1043 = vcombine.high %v1009, %v1025
        %v1045 = vunpack.c.l.s4 1934713408
        %v1046 = vunpack.c.0.s8 %v1045
        %v1047 = vlaneseq
        %v1048 = vshrl.u32 %v1047, 7
        %v1049 = vsub.s32 %v1046, %v1048
        %v1050 = vrot.slane %v1042, %v1049
        %v1052 = vunpack.c.l.s4 1934713408
        %v1053 = vunpack.c.0.s8 %v1052
        %v1054 = vlaneseq
        %v1055 = vshrl.u32 %v1054, 7
        %v1056 = vsub.s32 %v1053, %v1055
        %v1057 = vrot.slane %v1043, %v1056
        %v1058 = vcombine.high %v1034, 0.0
        %v1059 = vcombine.high %v1041, 0.0
        %v1060 = vcombine.high %v1050, 0.0
        %v1061 = vcombine.high %v1057, 0.0
        %v1062 = vcombine.low %v1034, %v1041
        %v1064 = vunpack.c.l.s4 1983009808
        %v1065 = vunpack.c.0.s8 %v1064
        %v1066 = vlaneseq
        %v1067 = vshrl.u32 %v1066, 7
        %v1068 = vsub.s32 %v1065, %v1067
        %v1069 = vrot.slane %v1062, %v1068
        %v1070 = vcombine.low %v1058, %v1059
        %v1072 = vunpack.c.l.s4 1983009808
        %v1073 = vunpack.c.0.s8 %v1072
        %v1074 = vlaneseq
        %v1075 = vshrl.u32 %v1074, 7
        %v1076 = vsub.s32 %v1073, %v1075
        %v1077 = vrot.slane %v1070, %v1076
        %v1078 = vcombine.low %v1050, %v1057
        %v1080 = vunpack.c.l.s4 1983009808
        %v1081 = vunpack.c.0.s8 %v1080
        %v1082 = vlaneseq
        %v1083 = vshrl.u32 %v1082, 7
        %v1084 = vsub.s32 %v1081, %v1083
        %v1085 = vrot.slane %v1078, %v1084
        %v1086 = vcombine.low %v1060, %v1061
        %v1088 = vunpack.c.l.s4 1983009808
        %v1089 = vunpack.c.0.s8 %v1088
        %v1090 = vlaneseq
        %v1091 = vshrl.u32 %v1090, 7
        %v1092 = vsub.s32 %v1089, %v1091
        %v1093 = vrot.slane %v1086, %v1092
        %v1094 = vcombine.low %v1069, %v1077
        %v1095 = vcombine.high %v1069, %v1077
        %v1097 = vunpack.c.l.s4 1934713408
        %v1098 = vunpack.c.0.s8 %v1097
        %v1099 = vlaneseq
        %v1100 = vshrl.u32 %v1099, 7
        %v1101 = vsub.s32 %v1098, %v1100
        %v1102 = vrot.slane %v1094, %v1101
        %v1104 = vunpack.c.l.s4 1934713408
        %v1105 = vunpack.c.0.s8 %v1104
        %v1106 = vlaneseq
        %v1107 = vshrl.u32 %v1106, 7
        %v1108 = vsub.s32 %v1105, %v1107
        %v1109 = vrot.slane %v1095, %v1108
        %v1110 = vcombine.low %v1085, %v1093
        %v1111 = vcombine.high %v1085, %v1093
        %v1113 = vunpack.c.l.s4 1934713408
        %v1114 = vunpack.c.0.s8 %v1113
        %v1115 = vlaneseq
        %v1116 = vshrl.u32 %v1115, 7
        %v1117 = vsub.s32 %v1114, %v1116
        %v1118 = vrot.slane %v1110, %v1117
        %v1120 = vunpack.c.l.s4 1934713408
        %v1121 = vunpack.c.0.s8 %v1120
        %v1122 = vlaneseq
        %v1123 = vshrl.u32 %v1122, 7
        %v1124 = vsub.s32 %v1121, %v1123
        %v1125 = vrot.slane %v1111, %v1124
        %v1126 = vcombine.low %v1102, %v1118
        %v1127 = vcombine.high %v1102, %v1118
        %v1128 = vcombine.low %v1109, %v1125
        %v1129 = vcombine.high %v1109, %v1125
        %v1130 = vpack.c.bf16 %v1126, %v1126
        %v1131 = vpack.c.bf16 %v1127, %v1127
        %v1132 = vpack.c.bf16 %v1128, %v1128
        %v1133 = vpack.c.bf16 %v1129, %v1129
        %v1134 = vld [vmem:[#allocation2] sm:$0xf]
        %v1135 = vld [vmem:[#allocation2 + $0x4] sm:$0xf]
        %v1136 = vld [vmem:[#allocation2 + $0x8] sm:$0xf]
        %v1137 = vld [vmem:[#allocation2 + $0xc] sm:$0xf]
        %v1138 = vld [vmem:[#allocation3] sm:$0xf]
        %v1139 = vld [vmem:[#allocation3 + $0x4] sm:$0xf]
        %v1140 = vld [vmem:[#allocation3 + $0x8] sm:$0xf]
        %v1141 = vld [vmem:[#allocation3 + $0xc] sm:$0xf]
        %vm1142 = vcmask 64512
        %v1144 = vsel %vm1142, %v1130, 0
        %v1147 = vsel %vm1142, %v1134, 0
        %1149 = vmatprep.subr.bf16.mxu0 0
        %1150 = vmatpush1.bf16.xpose.msra.mxu0 %v1147
        %1151 = vmatprep.subr.bf16.mxu0 0
        %1152 = vmatpush1.bf16.xpose.msra.mxu0 0
        %1153 = vmatprep.subr.bf16.mxu0 0
        %1154 = vmatpush1.bf16.xpose.msra.mxu0 0
        %1155 = vmatprep.subr.bf16.mxu0 0
        %1156 = vmatpush1.bf16.xpose.msra.mxu0 0
        %1157 = vmatprep.subr.bf16.mxu0 0
        %1158 = vmatpush1.bf16.xpose.msra.mxu0 0
        %1159 = vmatprep.subr.bf16.mxu0 0
        %1160 = vmatpush1.bf16.xpose.msra.mxu0 0
        %1161 = vmatprep.subr.bf16.mxu0 0
        %1162 = vmatpush1.bf16.xpose.msra.mxu0 0
        %1163 = vmatprep.subr.bf16.mxu0 0
        %1164 = vmatpush1.bf16.xpose.msra.mxu0 0
        %1165 = vmatprep.subr.bf16.mxu0 0
        %1166 = vmatpush1.bf16.xpose.msra.mxu0 0
        %1167 = vmatprep.subr.bf16.mxu0 0
        %1168 = vmatpush1.bf16.xpose.msra.mxu0 0
        %1169 = vmatprep.subr.bf16.mxu0 0
        %1170 = vmatpush1.bf16.xpose.msra.mxu0 0
        %1171 = vmatprep.subr.bf16.mxu0 0
        %1172 = vmatpush1.bf16.xpose.msra.mxu0 0
        %1173 = vmatprep.subr.bf16.mxu0 0
        %1174 = vmatpush1.bf16.xpose.msra.mxu0 0
        %1175 = vmatprep.subr.bf16.mxu0 0
        %1176 = vmatpush1.bf16.xpose.msra.mxu0 0
        %1177 = vmatprep.subr.bf16.mxu0 0
        %1178 = vmatpush1.bf16.xpose.msra.mxu0 0
        %1179 = vmatprep.subr.bf16.mxu0 0
        %1180 = vmatpush1.bf16.xpose.msra.mxu0 0
        %1181 = vmatprep.mubr.bf16.mxu0 0
        %1182 = vmatmul.mubr.bf16.gmra.mrb[0].mxu0 %v1144
        %v1183 = vpop.f32.mrb[0].mxu0
        %v1184 = vadd.f32 0.0, %v1183
        %v1185 = vpop.f32.mrb[0].mxu0
        %v1186 = vpop.f32.mrb[0].mxu0
        %v1187 = vpop.f32.mrb[0].mxu0
        %1188 = vdwg.mxu0
        %v1190 = vsel %vm1142, %v1131, 0
        %v1193 = vsel %vm1142, %v1135, 0
        %1195 = vmatprep.subr.bf16.mxu0 0
        %1196 = vmatpush1.bf16.xpose.msra.mxu0 %v1193
        %1197 = vmatprep.subr.bf16.mxu0 0
        %1198 = vmatpush1.bf16.xpose.msra.mxu0 0
        %1199 = vmatprep.subr.bf16.mxu0 0
        %1200 = vmatpush1.bf16.xpose.msra.mxu0 0
        %1201 = vmatprep.subr.bf16.mxu0 0
        %1202 = vmatpush1.bf16.xpose.msra.mxu0 0
        %1203 = vmatprep.subr.bf16.mxu0 0
        %1204 = vmatpush1.bf16.xpose.msra.mxu0 0
        %1205 = vmatprep.subr.bf16.mxu0 0
        %1206 = vmatpush1.bf16.xpose.msra.mxu0 0
        %1207 = vmatprep.subr.bf16.mxu0 0
        %1208 = vmatpush1.bf16.xpose.msra.mxu0 0
        %1209 = vmatprep.subr.bf16.mxu0 0
        %1210 = vmatpush1.bf16.xpose.msra.mxu0 0
        %1211 = vmatprep.subr.bf16.mxu0 0
        %1212 = vmatpush1.bf16.xpose.msra.mxu0 0
        %1213 = vmatprep.subr.bf16.mxu0 0
        %1214 = vmatpush1.bf16.xpose.msra.mxu0 0
        %1215 = vmatprep.subr.bf16.mxu0 0
        %1216 = vmatpush1.bf16.xpose.msra.mxu0 0
        %1217 = vmatprep.subr.bf16.mxu0 0
        %1218 = vmatpush1.bf16.xpose.msra.mxu0 0
        %1219 = vmatprep.subr.bf16.mxu0 0
        %1220 = vmatpush1.bf16.xpose.msra.mxu0 0
        %1221 = vmatprep.subr.bf16.mxu0 0
        %1222 = vmatpush1.bf16.xpose.msra.mxu0 0
        %1223 = vmatprep.subr.bf16.mxu0 0
        %1224 = vmatpush1.bf16.xpose.msra.mxu0 0
        %1225 = vmatprep.subr.bf16.mxu0 0
        %1226 = vmatpush1.bf16.xpose.msra.mxu0 0
        %1227 = vmatprep.mubr.bf16.mxu0 0
        %1228 = vmatmul.mubr.bf16.gmra.mrb[0].mxu0 %v1190
        %v1229 = vpop.f32.mrb[0].mxu0
        %v1230 = vadd.f32 0.0, %v1229
        %v1231 = vpop.f32.mrb[0].mxu0
        %v1232 = vpop.f32.mrb[0].mxu0
        %v1233 = vpop.f32.mrb[0].mxu0
        %1234 = vdwg.mxu0
        %v1236 = vsel %vm1142, %v1132, 0
        %v1239 = vsel %vm1142, %v1136, 0
        %1241 = vmatprep.subr.bf16.mxu0 0
        %1242 = vmatpush1.bf16.xpose.msra.mxu0 %v1239
        %1243 = vmatprep.subr.bf16.mxu0 0
        %1244 = vmatpush1.bf16.xpose.msra.mxu0 0
        %1245 = vmatprep.subr.bf16.mxu0 0
        %1246 = vmatpush1.bf16.xpose.msra.mxu0 0
        %1247 = vmatprep.subr.bf16.mxu0 0
        %1248 = vmatpush1.bf16.xpose.msra.mxu0 0
        %1249 = vmatprep.subr.bf16.mxu0 0
        %1250 = vmatpush1.bf16.xpose.msra.mxu0 0
        %1251 = vmatprep.subr.bf16.mxu0 0
        %1252 = vmatpush1.bf16.xpose.msra.mxu0 0
        %1253 = vmatprep.subr.bf16.mxu0 0
        %1254 = vmatpush1.bf16.xpose.msra.mxu0 0
        %1255 = vmatprep.subr.bf16.mxu0 0
        %1256 = vmatpush1.bf16.xpose.msra.mxu0 0
        %1257 = vmatprep.subr.bf16.mxu0 0
        %1258 = vmatpush1.bf16.xpose.msra.mxu0 0
        %1259 = vmatprep.subr.bf16.mxu0 0
        %1260 = vmatpush1.bf16.xpose.msra.mxu0 0
        %1261 = vmatprep.subr.bf16.mxu0 0
        %1262 = vmatpush1.bf16.xpose.msra.mxu0 0
        %1263 = vmatprep.subr.bf16.mxu0 0
        %1264 = vmatpush1.bf16.xpose.msra.mxu0 0
        %1265 = vmatprep.subr.bf16.mxu0 0
        %1266 = vmatpush1.bf16.xpose.msra.mxu0 0
        %1267 = vmatprep.subr.bf16.mxu0 0
        %1268 = vmatpush1.bf16.xpose.msra.mxu0 0
        %1269 = vmatprep.subr.bf16.mxu0 0
        %1270 = vmatpush1.bf16.xpose.msra.mxu0 0
        %1271 = vmatprep.subr.bf16.mxu0 0
        %1272 = vmatpush1.bf16.xpose.msra.mxu0 0
        %1273 = vmatprep.mubr.bf16.mxu0 0
        %1274 = vmatmul.mubr.bf16.gmra.mrb[0].mxu0 %v1236
        %v1275 = vpop.f32.mrb[0].mxu0
        %v1276 = vadd.f32 0.0, %v1275
        %v1277 = vpop.f32.mrb[0].mxu0
        %v1278 = vpop.f32.mrb[0].mxu0
        %v1279 = vpop.f32.mrb[0].mxu0
        %1280 = vdwg.mxu0
        %v1282 = vsel %vm1142, %v1133, 0
        %v1285 = vsel %vm1142, %v1137, 0
        %1287 = vmatprep.subr.bf16.mxu0 0
        %1288 = vmatpush1.bf16.xpose.msra.mxu0 %v1285
        %1289 = vmatprep.subr.bf16.mxu0 0
        %1290 = vmatpush1.bf16.xpose.msra.mxu0 0
        %1291 = vmatprep.subr.bf16.mxu0 0
        %1292 = vmatpush1.bf16.xpose.msra.mxu0 0
        %1293 = vmatprep.subr.bf16.mxu0 0
        %1294 = vmatpush1.bf16.xpose.msra.mxu0 0
        %1295 = vmatprep.subr.bf16.mxu0 0
        %1296 = vmatpush1.bf16.xpose.msra.mxu0 0
        %1297 = vmatprep.subr.bf16.mxu0 0
        %1298 = vmatpush1.bf16.xpose.msra.mxu0 0
        %1299 = vmatprep.subr.bf16.mxu0 0
        %1300 = vmatpush1.bf16.xpose.msra.mxu0 0
        %1301 = vmatprep.subr.bf16.mxu0 0
        %1302 = vmatpush1.bf16.xpose.msra.mxu0 0
        %1303 = vmatprep.subr.bf16.mxu0 0
        %1304 = vmatpush1.bf16.xpose.msra.mxu0 0
        %1305 = vmatprep.subr.bf16.mxu0 0
        %1306 = vmatpush1.bf16.xpose.msra.mxu0 0
        %1307 = vmatprep.subr.bf16.mxu0 0
        %1308 = vmatpush1.bf16.xpose.msra.mxu0 0
        %1309 = vmatprep.subr.bf16.mxu0 0
        %1310 = vmatpush1.bf16.xpose.msra.mxu0 0
        %1311 = vmatprep.subr.bf16.mxu0 0
        %1312 = vmatpush1.bf16.xpose.msra.mxu0 0
        %1313 = vmatprep.subr.bf16.mxu0 0
        %1314 = vmatpush1.bf16.xpose.msra.mxu0 0
        %1315 = vmatprep.subr.bf16.mxu0 0
        %1316 = vmatpush1.bf16.xpose.msra.mxu0 0
        %1317 = vmatprep.subr.bf16.mxu0 0
        %1318 = vmatpush1.bf16.xpose.msra.mxu0 0
        %1319 = vmatprep.mubr.bf16.mxu0 0
        %1320 = vmatmul.mubr.bf16.gmra.mrb[0].mxu0 %v1282
        %v1321 = vpop.f32.mrb[0].mxu0
        %v1322 = vadd.f32 0.0, %v1321
        %v1323 = vpop.f32.mrb[0].mxu0
        %v1324 = vpop.f32.mrb[0].mxu0
        %v1325 = vpop.f32.mrb[0].mxu0
        %1326 = vdwg.mxu0
        %v1327 = vsel %vm1142, %v1184, -inf
        %1328 = vmax.xlane.f32.xlu0 %v1327
        %v1329 = vpop.xlane.xlu0 %1328
        %v1330 = vsel %vm1142, %v1230, -inf
        %1331 = vmax.xlane.f32.xlu0 %v1330
        %v1332 = vpop.xlane.xlu0 %1331
        %v1333 = vsel %vm1142, %v1276, -inf
        %1334 = vmax.xlane.f32.xlu0 %v1333
        %v1335 = vpop.xlane.xlu0 %1334
        %v1336 = vsel %vm1142, %v1322, -inf
        %1337 = vmax.xlane.f32.xlu0 %v1336
        %v1338 = vpop.xlane.xlu0 %1337
        %v1339 = vsub.f32 -inf, %v1329
        %v1340 = vsub.f32 -inf, %v1332
        %v1341 = vsub.f32 -inf, %v1335
        %v1342 = vsub.f32 -inf, %v1338
        %v1343 = vmul.f32 %v1339, 1.442695
        %v1344 = vpow.pop %v1343
        %v1345 = vmul.f32 %v1340, 1.442695
        %v1346 = vpow.pop %v1345
        %v1347 = vmul.f32 %v1341, 1.442695
        %v1348 = vpow.pop %v1347
        %v1349 = vmul.f32 %v1342, 1.442695
        %v1350 = vpow.pop %v1349
        %v1351 = vsub.f32 %v1184, %v1329
        %v1352 = vsub.f32 %v1230, %v1332
        %v1353 = vsub.f32 %v1276, %v1335
        %v1354 = vsub.f32 %v1322, %v1338
        %v1355 = vmul.f32 %v1351, 1.442695
        %v1356 = vpow.pop %v1355
        %v1357 = vmul.f32 %v1352, 1.442695
        %v1358 = vpow.pop %v1357
        %v1359 = vmul.f32 %v1353, 1.442695
        %v1360 = vpow.pop %v1359
        %v1361 = vmul.f32 %v1354, 1.442695
        %v1362 = vpow.pop %v1361
        %v1363 = vmul.f32 %v1344, 0.0
        %v1364 = vmul.f32 %v1346, 0.0
        %v1365 = vmul.f32 %v1348, 0.0
        %v1366 = vmul.f32 %v1350, 0.0
        %v1367 = vsel %vm1142, %v1356, 0.0
        %1368 = vadd.xlane.f32.xlu0 %v1367
        %v1369 = vpop.xlane.xlu0 %1368
        %v1370 = vsel %vm1142, %v1358, 0.0
        %1371 = vadd.xlane.f32.xlu0 %v1370
        %v1372 = vpop.xlane.xlu0 %1371
        %v1373 = vsel %vm1142, %v1360, 0.0
        %1374 = vadd.xlane.f32.xlu0 %v1373
        %v1375 = vpop.xlane.xlu0 %1374
        %v1376 = vsel %vm1142, %v1362, 0.0
        %1377 = vadd.xlane.f32.xlu0 %v1376
        %v1378 = vpop.xlane.xlu0 %1377
        %v1379 = vadd.f32 %v1363, %v1369
        %v1380 = vadd.f32 %v1364, %v1372
        %v1381 = vadd.f32 %v1365, %v1375
        %v1382 = vadd.f32 %v1366, %v1378
        %v1383 = vpack.c.bf16 %v1356, %v1356
        %v1384 = vpack.c.bf16 %v1358, %v1358
        %v1385 = vpack.c.bf16 %v1360, %v1360
        %v1386 = vpack.c.bf16 %v1362, %v1362
        %v1388 = vsel %vm1142, %v1383, 0
        %vm1390 = vcmask 1043456
        %v1392 = vsel %vm1390, %v1138, 0
        %1394 = vmatprep.subr.bf16.mxu0 0
        %1395 = vmatpush1.bf16.msra.mxu0 %v1392
        %1396 = vmatprep.subr.bf16.mxu0 0
        %1397 = vmatpush1.bf16.msra.mxu0 0
        %1398 = vmatprep.subr.bf16.mxu0 0
        %1399 = vmatpush1.bf16.msra.mxu0 0
        %1400 = vmatprep.subr.bf16.mxu0 0
        %1401 = vmatpush1.bf16.msra.mxu0 0
        %1402 = vmatprep.subr.bf16.mxu0 0
        %1403 = vmatpush1.bf16.msra.mxu0 0
        %1404 = vmatprep.subr.bf16.mxu0 0
        %1405 = vmatpush1.bf16.msra.mxu0 0
        %1406 = vmatprep.subr.bf16.mxu0 0
        %1407 = vmatpush1.bf16.msra.mxu0 0
        %1408 = vmatprep.subr.bf16.mxu0 0
        %1409 = vmatpush1.bf16.msra.mxu0 0
        %1410 = vmatprep.subr.bf16.mxu0 0
        %1411 = vmatpush1.bf16.msra.mxu0 0
        %1412 = vmatprep.subr.bf16.mxu0 0
        %1413 = vmatpush1.bf16.msra.mxu0 0
        %1414 = vmatprep.subr.bf16.mxu0 0
        %1415 = vmatpush1.bf16.msra.mxu0 0
        %1416 = vmatprep.subr.bf16.mxu0 0
        %1417 = vmatpush1.bf16.msra.mxu0 0
        %1418 = vmatprep.subr.bf16.mxu0 0
        %1419 = vmatpush1.bf16.msra.mxu0 0
        %1420 = vmatprep.subr.bf16.mxu0 0
        %1421 = vmatpush1.bf16.msra.mxu0 0
        %1422 = vmatprep.subr.bf16.mxu0 0
        %1423 = vmatpush1.bf16.msra.mxu0 0
        %1424 = vmatprep.subr.bf16.mxu0 0
        %1425 = vmatpush1.bf16.msra.mxu0 0
        %1426 = vmatprep.mubr.bf16.mxu0 0
        %1427 = vmatmul.mubr.bf16.gmra.mrb[0].mxu0 %v1388
        %v1428 = vpop.f32.mrb[0].mxu0
        %v1429 = vadd.f32 0.0, %v1428
        %v1430 = vpop.f32.mrb[0].mxu0
        %v1431 = vpop.f32.mrb[0].mxu0
        %v1432 = vpop.f32.mrb[0].mxu0
        %1433 = vdwg.mxu0
        %v1435 = vsel %vm1142, %v1384, 0
        %v1438 = vsel %vm1390, %v1139, 0
        %1440 = vmatprep.subr.bf16.mxu0 0
        %1441 = vmatpush1.bf16.msra.mxu0 %v1438
        %1442 = vmatprep.subr.bf16.mxu0 0
        %1443 = vmatpush1.bf16.msra.mxu0 0
        %1444 = vmatprep.subr.bf16.mxu0 0
        %1445 = vmatpush1.bf16.msra.mxu0 0
        %1446 = vmatprep.subr.bf16.mxu0 0
        %1447 = vmatpush1.bf16.msra.mxu0 0
        %1448 = vmatprep.subr.bf16.mxu0 0
        %1449 = vmatpush1.bf16.msra.mxu0 0
        %1450 = vmatprep.subr.bf16.mxu0 0
        %1451 = vmatpush1.bf16.msra.mxu0 0
        %1452 = vmatprep.subr.bf16.mxu0 0
        %1453 = vmatpush1.bf16.msra.mxu0 0
        %1454 = vmatprep.subr.bf16.mxu0 0
        %1455 = vmatpush1.bf16.msra.mxu0 0
        %1456 = vmatprep.subr.bf16.mxu0 0
        %1457 = vmatpush1.bf16.msra.mxu0 0
        %1458 = vmatprep.subr.bf16.mxu0 0
        %1459 = vmatpush1.bf16.msra.mxu0 0
        %1460 = vmatprep.subr.bf16.mxu0 0
        %1461 = vmatpush1.bf16.msra.mxu0 0
        %1462 = vmatprep.subr.bf16.mxu0 0
        %1463 = vmatpush1.bf16.msra.mxu0 0
        %1464 = vmatprep.subr.bf16.mxu0 0
        %1465 = vmatpush1.bf16.msra.mxu0 0
        %1466 = vmatprep.subr.bf16.mxu0 0
        %1467 = vmatpush1.bf16.msra.mxu0 0
        %1468 = vmatprep.subr.bf16.mxu0 0
        %1469 = vmatpush1.bf16.msra.mxu0 0
        %1470 = vmatprep.subr.bf16.mxu0 0
        %1471 = vmatpush1.bf16.msra.mxu0 0
        %1472 = vmatprep.mubr.bf16.mxu0 0
        %1473 = vmatmul.mubr.bf16.gmra.mrb[0].mxu0 %v1435
        %v1474 = vpop.f32.mrb[0].mxu0
        %v1475 = vadd.f32 0.0, %v1474
        %v1476 = vpop.f32.mrb[0].mxu0
        %v1477 = vpop.f32.mrb[0].mxu0
        %v1478 = vpop.f32.mrb[0].mxu0
        %1479 = vdwg.mxu0
        %v1481 = vsel %vm1142, %v1385, 0
        %v1484 = vsel %vm1390, %v1140, 0
        %1486 = vmatprep.subr.bf16.mxu0 0
        %1487 = vmatpush1.bf16.msra.mxu0 %v1484
        %1488 = vmatprep.subr.bf16.mxu0 0
        %1489 = vmatpush1.bf16.msra.mxu0 0
        %1490 = vmatprep.subr.bf16.mxu0 0
        %1491 = vmatpush1.bf16.msra.mxu0 0
        %1492 = vmatprep.subr.bf16.mxu0 0
        %1493 = vmatpush1.bf16.msra.mxu0 0
        %1494 = vmatprep.subr.bf16.mxu0 0
        %1495 = vmatpush1.bf16.msra.mxu0 0
        %1496 = vmatprep.subr.bf16.mxu0 0
        %1497 = vmatpush1.bf16.msra.mxu0 0
        %1498 = vmatprep.subr.bf16.mxu0 0
        %1499 = vmatpush1.bf16.msra.mxu0 0
        %1500 = vmatprep.subr.bf16.mxu0 0
        %1501 = vmatpush1.bf16.msra.mxu0 0
        %1502 = vmatprep.subr.bf16.mxu0 0
        %1503 = vmatpush1.bf16.msra.mxu0 0
        %1504 = vmatprep.subr.bf16.mxu0 0
        %1505 = vmatpush1.bf16.msra.mxu0 0
        %1506 = vmatprep.subr.bf16.mxu0 0
        %1507 = vmatpush1.bf16.msra.mxu0 0
        %1508 = vmatprep.subr.bf16.mxu0 0
        %1509 = vmatpush1.bf16.msra.mxu0 0
        %1510 = vmatprep.subr.bf16.mxu0 0
        %1511 = vmatpush1.bf16.msra.mxu0 0
        %1512 = vmatprep.subr.bf16.mxu0 0
        %1513 = vmatpush1.bf16.msra.mxu0 0
        %1514 = vmatprep.subr.bf16.mxu0 0
        %1515 = vmatpush1.bf16.msra.mxu0 0
        %1516 = vmatprep.subr.bf16.mxu0 0
        %1517 = vmatpush1.bf16.msra.mxu0 0
        %1518 = vmatprep.mubr.bf16.mxu0 0
        %1519 = vmatmul.mubr.bf16.gmra.mrb[0].mxu0 %v1481
        %v1520 = vpop.f32.mrb[0].mxu0
        %v1521 = vadd.f32 0.0, %v1520
        %v1522 = vpop.f32.mrb[0].mxu0
        %v1523 = vpop.f32.mrb[0].mxu0
        %v1524 = vpop.f32.mrb[0].mxu0
        %1525 = vdwg.mxu0
        %v1527 = vsel %vm1142, %v1386, 0
        %v1530 = vsel %vm1390, %v1141, 0
        %1532 = vmatprep.subr.bf16.mxu0 0
        %1533 = vmatpush1.bf16.msra.mxu0 %v1530
        %1534 = vmatprep.subr.bf16.mxu0 0
        %1535 = vmatpush1.bf16.msra.mxu0 0
        %1536 = vmatprep.subr.bf16.mxu0 0
        %1537 = vmatpush1.bf16.msra.mxu0 0
        %1538 = vmatprep.subr.bf16.mxu0 0
        %1539 = vmatpush1.bf16.msra.mxu0 0
        %1540 = vmatprep.subr.bf16.mxu0 0
        %1541 = vmatpush1.bf16.msra.mxu0 0
        %1542 = vmatprep.subr.bf16.mxu0 0
        %1543 = vmatpush1.bf16.msra.mxu0 0
        %1544 = vmatprep.subr.bf16.mxu0 0
        %1545 = vmatpush1.bf16.msra.mxu0 0
        %1546 = vmatprep.subr.bf16.mxu0 0
        %1547 = vmatpush1.bf16.msra.mxu0 0
        %1548 = vmatprep.subr.bf16.mxu0 0
        %1549 = vmatpush1.bf16.msra.mxu0 0
        %1550 = vmatprep.subr.bf16.mxu0 0
        %1551 = vmatpush1.bf16.msra.mxu0 0
        %1552 = vmatprep.subr.bf16.mxu0 0
        %1553 = vmatpush1.bf16.msra.mxu0 0
        %1554 = vmatprep.subr.bf16.mxu0 0
        %1555 = vmatpush1.bf16.msra.mxu0 0
        %1556 = vmatprep.subr.bf16.mxu0 0
        %1557 = vmatpush1.bf16.msra.mxu0 0
        %1558 = vmatprep.subr.bf16.mxu0 0
        %1559 = vmatpush1.bf16.msra.mxu0 0
        %1560 = vmatprep.subr.bf16.mxu0 0
        %1561 = vmatpush1.bf16.msra.mxu0 0
        %1562 = vmatprep.subr.bf16.mxu0 0
        %1563 = vmatpush1.bf16.msra.mxu0 0
        %1564 = vmatprep.mubr.bf16.mxu0 0
        %1565 = vmatmul.mubr.bf16.gmra.mrb[0].mxu0 %v1527
        %v1566 = vpop.f32.mrb[0].mxu0
        %v1567 = vadd.f32 0.0, %v1566
        %v1568 = vpop.f32.mrb[0].mxu0
        %v1569 = vpop.f32.mrb[0].mxu0
        %v1570 = vpop.f32.mrb[0].mxu0
        %1571 = vdwg.mxu0
        %v1572 = vadd.f32 %v1363, %v1429
        %v1573 = vadd.f32 %v1364, %v1475
        %v1574 = vadd.f32 %v1365, %v1521
        %v1575 = vadd.f32 %v1366, %v1567
        %v1576 = vrcp.pop %v1379
        %v1577 = vrcp.pop %v1380
        %v1578 = vrcp.pop %v1381
        %v1579 = vrcp.pop %v1382
        %v1580 = vmul.f32 %v1572, %v1576
        %v1581 = vmul.f32 %v1573, %v1577
        %v1582 = vmul.f32 %v1574, %v1578
        %v1583 = vmul.f32 %v1575, %v1579
        %v1584 = vcombine.low %v1580, %v1582
        %v1585 = vcombine.high %v1580, %v1582
        %v1587 = vunpack.c.l.s4 1983009808
        %v1588 = vunpack.c.0.s8 %v1587
        %v1589 = vlaneseq
        %v1590 = vshrl.u32 %v1589, 7
        %v1591 = vsub.s32 %v1588, %v1590
        %v1592 = vrot.slane %v1584, %v1591
        %v1594 = vunpack.c.l.s4 1983009808
        %v1595 = vunpack.c.0.s8 %v1594
        %v1596 = vlaneseq
        %v1597 = vshrl.u32 %v1596, 7
        %v1598 = vsub.s32 %v1595, %v1597
        %v1599 = vrot.slane %v1585, %v1598
        %v1600 = vcombine.low %v1581, %v1583
        %v1601 = vcombine.high %v1581, %v1583
        %v1603 = vunpack.c.l.s4 1983009808
        %v1604 = vunpack.c.0.s8 %v1603
        %v1605 = vlaneseq
        %v1606 = vshrl.u32 %v1605, 7
        %v1607 = vsub.s32 %v1604, %v1606
        %v1608 = vrot.slane %v1600, %v1607
        %v1610 = vunpack.c.l.s4 1983009808
        %v1611 = vunpack.c.0.s8 %v1610
        %v1612 = vlaneseq
        %v1613 = vshrl.u32 %v1612, 7
        %v1614 = vsub.s32 %v1611, %v1613
        %v1615 = vrot.slane %v1601, %v1614
        %v1616 = vcombine.low %v1592, %v1608
        %v1617 = vcombine.high %v1592, %v1608
        %v1619 = vunpack.c.l.s4 1934713408
        %v1620 = vunpack.c.0.s8 %v1619
        %v1621 = vlaneseq
        %v1622 = vshrl.u32 %v1621, 7
        %v1623 = vsub.s32 %v1620, %v1622
        %v1624 = vrot.slane %v1616, %v1623
        %v1626 = vunpack.c.l.s4 1934713408
        %v1627 = vunpack.c.0.s8 %v1626
        %v1628 = vlaneseq
        %v1629 = vshrl.u32 %v1628, 7
        %v1630 = vsub.s32 %v1627, %v1629
        %v1631 = vrot.slane %v1617, %v1630
        %v1632 = vcombine.low %v1599, %v1615
        %v1633 = vcombine.high %v1599, %v1615
        %v1635 = vunpack.c.l.s4 1934713408
        %v1636 = vunpack.c.0.s8 %v1635
        %v1637 = vlaneseq
        %v1638 = vshrl.u32 %v1637, 7
        %v1639 = vsub.s32 %v1636, %v1638
        %v1640 = vrot.slane %v1632, %v1639
        %v1642 = vunpack.c.l.s4 1934713408
        %v1643 = vunpack.c.0.s8 %v1642
        %v1644 = vlaneseq
        %v1645 = vshrl.u32 %v1644, 7
        %v1646 = vsub.s32 %v1643, %v1645
        %v1647 = vrot.slane %v1633, %v1646
        %v1648 = vcombine.high %v1624, 0.0
        %v1649 = vcombine.high %v1631, 0.0
        %v1650 = vcombine.high %v1640, 0.0
        %v1651 = vcombine.high %v1647, 0.0
        %v1652 = vcombine.low %v1624, %v1631
        %v1654 = vunpack.c.l.s4 1983009808
        %v1655 = vunpack.c.0.s8 %v1654
        %v1656 = vlaneseq
        %v1657 = vshrl.u32 %v1656, 7
        %v1658 = vsub.s32 %v1655, %v1657
        %v1659 = vrot.slane %v1652, %v1658
        %v1660 = vcombine.low %v1648, %v1649
        %v1662 = vunpack.c.l.s4 1983009808
        %v1663 = vunpack.c.0.s8 %v1662
        %v1664 = vlaneseq
        %v1665 = vshrl.u32 %v1664, 7
        %v1666 = vsub.s32 %v1663, %v1665
        %v1667 = vrot.slane %v1660, %v1666
        %v1668 = vcombine.low %v1640, %v1647
        %v1670 = vunpack.c.l.s4 1983009808
        %v1671 = vunpack.c.0.s8 %v1670
        %v1672 = vlaneseq
        %v1673 = vshrl.u32 %v1672, 7
        %v1674 = vsub.s32 %v1671, %v1673
        %v1675 = vrot.slane %v1668, %v1674
        %v1676 = vcombine.low %v1650, %v1651
        %v1678 = vunpack.c.l.s4 1983009808
        %v1679 = vunpack.c.0.s8 %v1678
        %v1680 = vlaneseq
        %v1681 = vshrl.u32 %v1680, 7
        %v1682 = vsub.s32 %v1679, %v1681
        %v1683 = vrot.slane %v1676, %v1682
        %v1684 = vcombine.low %v1659, %v1667
        %v1685 = vcombine.high %v1659, %v1667
        %v1687 = vunpack.c.l.s4 1934713408
        %v1688 = vunpack.c.0.s8 %v1687
        %v1689 = vlaneseq
        %v1690 = vshrl.u32 %v1689, 7
        %v1691 = vsub.s32 %v1688, %v1690
        %v1692 = vrot.slane %v1684, %v1691
        %v1694 = vunpack.c.l.s4 1934713408
        %v1695 = vunpack.c.0.s8 %v1694
        %v1696 = vlaneseq
        %v1697 = vshrl.u32 %v1696, 7
        %v1698 = vsub.s32 %v1695, %v1697
        %v1699 = vrot.slane %v1685, %v1698
        %v1700 = vcombine.low %v1675, %v1683
        %v1701 = vcombine.high %v1675, %v1683
        %v1703 = vunpack.c.l.s4 1934713408
        %v1704 = vunpack.c.0.s8 %v1703
        %v1705 = vlaneseq
        %v1706 = vshrl.u32 %v1705, 7
        %v1707 = vsub.s32 %v1704, %v1706
        %v1708 = vrot.slane %v1700, %v1707
        %v1710 = vunpack.c.l.s4 1934713408
        %v1711 = vunpack.c.0.s8 %v1710
        %v1712 = vlaneseq
        %v1713 = vshrl.u32 %v1712, 7
        %v1714 = vsub.s32 %v1711, %v1713
        %v1715 = vrot.slane %v1701, %v1714
        %v1716 = vcombine.low %v1692, %v1708
        %v1717 = vcombine.high %v1692, %v1708
        %v1718 = vcombine.low %v1699, %v1715
        %v1719 = vcombine.high %v1699, %v1715
        %1721 = vrot.lane.b32.xlu0 %v1717, 8
        %v1722 = vpop.permute.xlu0 %1721
        %1725 = vrot.lane.b32.xlu0 %v1718, 16
        %v1726 = vpop.permute.xlu0 %1725
        %1729 = vrot.lane.b32.xlu0 %v1719, 24
        %v1730 = vpop.permute.xlu0 %1729
        %v1732 = vsel %vm1142, %v1716, %v1722
        %vm1733 = vcmask 130048
        %v1734 = vsel %vm1733, %v1732, %v1726
        %vm1735 = vcmask 195584
        %v1736 = vsel %vm1735, %v1734, %v1730
        %v1737 = vpack.c.bf16 %v1736, %v1736
        %v1738 = vld [vmem:[#allocation10] sm:$0xf]
        %v1739 = vld [vmem:[#allocation10 + $0x4] sm:$0xf]
        %v1740 = vld [vmem:[#allocation10 + $0x8] sm:$0xf]
        %v1741 = vld [vmem:[#allocation10 + $0xc] sm:$0xf]
        %v1742 = vld [vmem:[%s5] sm:$0x1]
        %v1744 = vlaneseq
        %v1745 = vshrl.u32 %v1744, 7
        %v1746 = vsub.s32 0, %v1745
        %v1747 = vrot.slane %v1742, %v1746
        %v1753 = vunpack.c.l.b16 %v1738
        %v1754 = vunpack.c.l.b16 %v1739
        %v1755 = vunpack.c.l.b16 %v1740
        %v1756 = vunpack.c.l.b16 %v1741
        %v1757 = vpack.c.b16 %v1754, %v1753
        %v1758 = vpack.c.b16 %v1756, %v1755
        %v1762 = vsel %vm887, %v1737, 0
        %1764 = vmatprep.subr.bf16.mxu0 0
        %1765 = vmatpush1.bf16.msra.mxu0 %v1757
        %1766 = vmatprep.subr.bf16.mxu0 0
        %1767 = vmatpush1.bf16.msra.mxu0 %v1758
        %1768 = vmatprep.subr.bf16.mxu0 0
        %1769 = vmatpush1.bf16.msra.mxu0 0
        %1770 = vmatprep.subr.bf16.mxu0 0
        %1771 = vmatpush1.bf16.msra.mxu0 0
        %1772 = vmatprep.subr.bf16.mxu0 0
        %1773 = vmatpush1.bf16.msra.mxu0 0
        %1774 = vmatprep.subr.bf16.mxu0 0
        %1775 = vmatpush1.bf16.msra.mxu0 0
        %1776 = vmatprep.subr.bf16.mxu0 0
        %1777 = vmatpush1.bf16.msra.mxu0 0
        %1778 = vmatprep.subr.bf16.mxu0 0
        %1779 = vmatpush1.bf16.msra.mxu0 0
        %1780 = vmatprep.subr.bf16.mxu0 0
        %1781 = vmatpush1.bf16.msra.mxu0 0
        %1782 = vmatprep.subr.bf16.mxu0 0
        %1783 = vmatpush1.bf16.msra.mxu0 0
        %1784 = vmatprep.subr.bf16.mxu0 0
        %1785 = vmatpush1.bf16.msra.mxu0 0
        %1786 = vmatprep.subr.bf16.mxu0 0
        %1787 = vmatpush1.bf16.msra.mxu0 0
        %1788 = vmatprep.subr.bf16.mxu0 0
        %1789 = vmatpush1.bf16.msra.mxu0 0
        %1790 = vmatprep.subr.bf16.mxu0 0
        %1791 = vmatpush1.bf16.msra.mxu0 0
        %1792 = vmatprep.subr.bf16.mxu0 0
        %1793 = vmatpush1.bf16.msra.mxu0 0
        %1794 = vmatprep.subr.bf16.mxu0 0
        %1795 = vmatpush1.bf16.msra.mxu0 0
        %1796 = vmatprep.mubr.bf16.mxu0 0
        %1797 = vmatmul.mubr.bf16.gmra.mrb[0].mxu0 %v1762
        %v1798 = vpop.f32.mrb[0].mxu0
        %v1799 = vadd.f32 %v1747, %v1798
        %v1800 = vpop.f32.mrb[0].mxu0
        %v1801 = vpop.f32.mrb[0].mxu0
        %v1802 = vpop.f32.mrb[0].mxu0
        %1803 = vdwg.mxu0
        %v1804 = vadd.f32 %v884, %v1799
        %1805 = vst.msk [vmem:[%s403] sm:$0xff] %vm887, %v1804
        %s1806 = sand.u32 %s231, 1
        %s1807 = scalar_lea.sflag [#allocation6], %s1806
        %s1808 = sand.u32 %s231, 1
        %s1809 = smul.addr %s1808, 8
        %s1810 = scalar_lea.vmem [#allocation12], %s1809
        // Predicated region
        $region73: #{tpu_custom_call.1} parent=51 // pred_check
          %p1811 = pneg %p241
        $region74: #{tpu_custom_call.1} parent=51 // pred_check_branch
          %1813 = sbr.rel (%p1811) target = $region76
        $region75: #{tpu_custom_call.1} parent=51 // pred_region
          %s1815 = ssub.s32 128, 128
          %1816 = vsyncadd %s1807, %s1815
          %s1817 = sadd.s32 %s34, %s33
          %s1818 = smul.addr %s1817, 128
          %s1819 = scalar_lea.hbm %s8, %s1818
          %s1821 = sshll.u32 %s1810, 4
          %s1822 = int_to_ptr.vmem [resolvable:$true] %s1821
          %1824 = dma.vmem_to_hbm [thread:$0]  %s1822, 128, %s1819, %s1807
        $region76: #{tpu_custom_call.1} parent=51 // pred_fallthru
          _
      $region52: #{tpu_custom_call.1} parent=5 // pred_fallthru
        _
      %p1825 = scmp.le.s32.totalorder 2, %s24
      // Predicated region
      $region77: #{tpu_custom_call.1} parent=5 // pred_check
        %p1826 = pneg %p1825
      $region78: #{tpu_custom_call.1} parent=5 // pred_check_branch
        %1828 = sbr.rel (%p1826) target = $region80
      $region79: #{tpu_custom_call.1} parent=5 // pred_region
        %s1829 = ssub.s32 %s24, 2
        // Predicated region
        $region81: #{tpu_custom_call.1} parent=79 // pred_check
          %p1830 = pneg %p247
        $region82: #{tpu_custom_call.1} parent=79 // pred_check_branch
          %1832 = sbr.rel (%p1830) target = $region84
        $region83: #{tpu_custom_call.1} parent=79 // pred_region
          %s1833 = sand.u32 %s232, 1
          %s1834 = scalar_lea.sflag [#allocation6], %s1833
          %s1835 = sand.u32 %s232, 1
          %s1836 = smul.addr %s1835, 8
          %s1837 = scalar_lea.vmem [#allocation12], %s1836
          %1838 = dma.done %s1834, 128
        $region84: #{tpu_custom_call.1} parent=79 // pred_fallthru
          _
      $region80: #{tpu_custom_call.1} parent=5 // pred_fallthru
        _
    $region6: #{tpu_custom_call.1} parent=1 // loop_footer
      %s28 = sadd.s32 1, %s24
    $region7: #{tpu_custom_call.1} parent=1 // loop_footer_branch
      %23 = sbr.rel target = $region3
    $region8: #{tpu_custom_call.1} parent=1 // loop_exit
      _
    %1839 = vsyncpa [#allocation5], 1
    %s1840 = scalar_lea.sflag [#allocation5], 1
    %1841 = vsyncpa %s1840, 1
    %1842 = vsyncpa [#allocation8], 1
    %s1843 = scalar_lea.sflag [#allocation8], 1
    %1844 = vsyncpa %s1843, 1
    %1845 = vsyncpa [#allocation11], 1
    %1846 = vsyncpa [#allocation6], 1
    %s1847 = scalar_lea.sflag [#allocation6], 1
    %1848 = vsyncpa %s1847, 1

</llo_original>
